<compile_context>
chip_gen: v7x
topology: tpu7x:2x2x1
jax: 0.10.0
libtpu: 0.0.40
codegen_flags: <defaults>
</compile_context>

<pallas_src>
import functools

import jax
import jax.numpy as jnp
from jax.experimental import pallas as pl
from jax.experimental.pallas import tpu as pltpu

GAMMA = 1e-4          # gamma from __init__ default
ALPHA = 0.9           # EMA coefficient
_NEG_BIG = -1e30      # bias for padded classes -> softmax prob exactly 0
_MAX_TILE_N = 2048


def _round_up(x, m):
    return (x + m - 1) // m * m


def _cdiv(a, b):
    return -(-a // b)


def _vmem_budget_and_limit():
    """Generation-aware VMEM sizing: ~75% of physical VMEM as the tile budget,
    ~85% as the compiler scoped-VMEM limit.  128 MiB on v5e/v6e, 64 MiB on v7x;
    conservative 64 MiB fallback if the query fails."""
    try:
        cap = int(pltpu.get_tpu_info().vmem_capacity_bytes)
    except Exception:
        cap = 64 * 1024 * 1024
    return (cap * 3) // 4, (cap * 17) // 20


def _choose_tile_n(n, d_k, c_pad, x_itemsize, budget):
    """Largest row tile (multiple of 8, <= _MAX_TILE_N) whose working set fits
    the VMEM budget.  Counts: streaming X (+ out in pass 2) tiles double-
    buffered, single-buffered bf16 W_fn / W_new + f32 bias, and the pass-1
    (1, C, D) f32 partial-accumulator output block (double-buffered)."""
    inv = 2 * c_pad * d_k + 2 * c_pad * d_k + 4 * c_pad     # W_fn + W_new (bf16) + bias (f32)
    part = 2 * 4 * c_pad * d_k                              # pass-1 f32 output block x2
    resident = inv + part                                   # conservative max over both passes
    per_row = max(2 * d_k * x_itemsize,                     # pass 1: X in (x2 buffers)
                  2 * 2 * d_k * x_itemsize)                 # pass 2: X in + out (x2 buffers)

    tile = _MAX_TILE_N
    while tile > 8 and resident + tile * per_row > budget:
        tile //= 2

    if n >= 8:
        tile = max(8, min(tile, (n // 8) * 8))              # stay a multiple of 8, never > array
    else:
        tile = n                                            # block == full (tiny) array
    return tile


def _softmax_rows(logits, *, approx):
    """Numerically stable softmax over the last axis (f32 in, f32 out)."""
    m = jnp.max(logits, axis=-1, keepdims=True)
    e = jnp.exp(logits - m)
    s = jnp.sum(e, axis=-1, keepdims=True)
    if approx:
        return e * pl.reciprocal(s, approx=True)
    return e / s


def _stats_kernel(x_ref, wfn_ref, bfn_ref, part_ref, *,
                  n_rows, tile_n, tiles_per_split):
    t = pl.program_id(1)

    @pl.when(t == 0)
    def _():
        part_ref[...] = jnp.zeros_like(part_ref)

    # Logical (unclamped) row range of this tile -> mask padded / OOB rows so
    # they contribute exactly zero to P^T X (edge-block padding is undefined).
    row0 = (pl.program_id(0) * tiles_per_split + t) * tile_n
    row_ids = row0 + jax.lax.broadcasted_iota(jnp.int32, (tile_n, 1), 0)
    valid = row_ids < n_rows                                          # (tile_n, 1)

    x_bf = jnp.where(valid, x_ref[...], 0).astype(jnp.bfloat16)       # (tile_n, D)

    # logits = X @ W_fn^T + b : contract dim 1 of both operands (no XLU .T).
    logits = jax.lax.dot_general(
        x_bf, wfn_ref[...], (((1,), (1,)), ((), ())),
        preferred_element_type=jnp.float32) + bfn_ref[...]            # (tile_n, C)
    # Exact reciprocal here: this path feeds the persistent EMA buffer.
    p = _softmax_rows(logits, approx=False)
    p_bf = jnp.where(valid, p, 0.0).astype(jnp.bfloat16)

    # partial += P^T @ X : contract dim 0 of both operands (no XLU .T of P).
    part_ref[0] = part_ref[0] + jax.lax.dot_general(
        p_bf, x_bf, (((0,), (0,)), ((), ())),
        preferred_element_type=jnp.float32)                           # (C, D)


def _apply_kernel(x_ref, wfn_ref, bfn_ref, wm_ref, out_ref, *, gamma):
    x = x_ref[...]
    x_bf = x.astype(jnp.bfloat16)

    logits = jax.lax.dot_general(
        x_bf, wfn_ref[...], (((1,), (1,)), ((), ())),
        preferred_element_type=jnp.float32) + bfn_ref[...]
    p = _softmax_rows(logits, approx=True)

    # Fold gamma into the (tile_n, C) matrix (cheaper than scaling (tile_n, D)).
    p_g = (p * gamma).astype(jnp.bfloat16)
    delta = jnp.dot(p_g, wm_ref[...], preferred_element_type=jnp.float32)
    out_ref[...] = (x.astype(jnp.float32) + delta).astype(out_ref.dtype)


@functools.partial(jax.jit, static_argnames=("tile_n", "single_buffer_weights"))
def compression_forward(x, w_fn, b_fn, weighted_means, *,
                        tile_n=None, single_buffer_weights=True):
    """Returns (out, updated weighted_means buffer)."""
    n, d = x.shape
    c = w_fn.shape[0]

    budget, vmem_limit = _vmem_budget_and_limit()

    c_pad = _round_up(c, 128)              # padded classes get -1e30 bias -> P exactly 0
    d_aligned = (d % 128 == 0)
    d_k = d if d_aligned else _round_up(d, 128)

    n_floor8 = (n // 8) * 8
    if tile_n is None:
        tile_n = _choose_tile_n(n, d_k, c_pad, x.dtype.itemsize, budget)
    elif n >= 8:
        tile_n = max(8, min(_round_up(int(tile_n), 8), n_floor8))
    else:
        tile_n = n

    n_tiles = _cdiv(n, tile_n)
    # v7x: split the stats reduction across the two TensorCores (leading
    # "parallel" axis); partials are blended in a tiny f32 op below.
    num_splits = 2 if n_tiles >= 2 else 1
    tiles_per_split = _cdiv(n_tiles, num_splits)

    def _invariant_spec(block_shape, index_map):
        """Grid-invariant block: single-buffered (nothing to pipeline)."""
        if single_buffer_weights and hasattr(pl, "Buffered"):
            try:
                return pl.BlockSpec(block_shape, index_map,
                                    pipeline_mode=pl.Buffered(1))
            except TypeError:
                pass
        return pl.BlockSpec(block_shape, index_map)

    # --- small, one-time weight prep (X is untouched when D is 128-aligned) ---
    x_in = x if d_aligned else jnp.pad(x, ((0, 0), (0, d_k - d)))
    wfn_bf = jnp.pad(w_fn, ((0, c_pad - c), (0, d_k - d))).astype(jnp.bfloat16)
    bfn_p = jnp.pad(b_fn.reshape(1, c).astype(jnp.float32),
                    ((0, 0), (0, c_pad - c)), constant_values=_NEG_BIG)
    wm_p = jnp.pad(weighted_means.astype(jnp.float32),
                   ((0, c_pad - c), (0, d_k - d)))

    # --- pass 1: partial P^T X per split (reduction over the tile axis) ---
    x_spec_1 = pl.BlockSpec(
        (tile_n, d_k),
        lambda s, t: (jnp.minimum(s * tiles_per_split + t, n_tiles - 1), 0))
    wfn_spec_1 = _invariant_spec((c_pad, d_k), lambda s, t: (0, 0))
    bias_spec_1 = _invariant_spec((1, c_pad), lambda s, t: (0, 0))
    part_spec = pl.BlockSpec((1, c_pad, d_k), lambda s, t: (s, 0, 0))

    partials = pl.pallas_call(
        functools.partial(_stats_kernel, n_rows=n, tile_n=tile_n,
                          tiles_per_split=tiles_per_split),
        out_shape=jax.ShapeDtypeStruct((num_splits, c_pad, d_k), jnp.float32),
        grid_spec=pltpu.PrefetchScalarGridSpec(
            num_scalar_prefetch=0,
            grid=(num_splits, tiles_per_split),
            in_specs=[x_spec_1, wfn_spec_1, bias_spec_1],
            out_specs=part_spec,
        ),
        compiler_params=pltpu.CompilerParams(
            dimension_semantics=("parallel", "arbitrary"),
            vmem_limit_bytes=vmem_limit,
        ),
    )(x_in, wfn_bf, bfn_p)

    # --- exact f32 EMA blend (tiny: C x D) ---
    wm_new_full = wm_p * ALPHA + jnp.sum(partials, axis=0) * ((1.0 - ALPHA) / n)
    wm_new_bf = wm_new_full.astype(jnp.bfloat16)

    # --- pass 2: out = X + gamma * P @ W_new (independent per N tile) ---
    x_spec_2 = pl.BlockSpec((tile_n, d_k), lambda i: (i, 0))
    wfn_spec_2 = _invariant_spec((c_pad, d_k), lambda i: (0, 0))
    bias_spec_2 = _invariant_spec((1, c_pad), lambda i: (0, 0))
    wm_spec_2 = _invariant_spec((c_pad, d_k), lambda i: (0, 0))

    out_p = pl.pallas_call(
        functools.partial(_apply_kernel, gamma=GAMMA),
        out_shape=jax.ShapeDtypeStruct((n, d_k), x.dtype),
        grid_spec=pltpu.PrefetchScalarGridSpec(
            num_scalar_prefetch=0,
            grid=(n_tiles,),
            in_specs=[x_spec_2, wfn_spec_2, bias_spec_2, wm_spec_2],
            out_specs=x_spec_2,
        ),
        compiler_params=pltpu.CompilerParams(
            dimension_semantics=("parallel",),
            vmem_limit_bytes=vmem_limit,
        ),
    )(x_in, wfn_bf, bfn_p, wm_new_bf)

    out = out_p if d_aligned else out_p[:, :d]
    wm_new = wm_new_full[:c, :d].astype(weighted_means.dtype)
    return out, wm_new


def compression_reference(x, w_fn, b_fn, weighted_means):
    logits = x @ w_fn.T + b_fn
    p = jax.nn.softmax(logits, axis=-1)
    current_mean = (p.T @ x) / x.shape[0]
    wm_new = weighted_means * ALPHA + current_mean * (1.0 - ALPHA)
    out = x + GAMMA * (p @ wm_new)
    return out, wm_new


if __name__ == "__main__":
    key = jax.random.PRNGKey(0)

    def make_inputs(k, n, dim, num_classes):
        kx, kw, kb, km = jax.random.split(k, 4)
        bound = 1.0 / (dim ** 0.5)
        x = jax.random.normal(kx, (n, dim), dtype=jnp.float32)
        w_fn = jax.random.uniform(kw, (num_classes, dim), jnp.float32, -bound, bound)
        b_fn = jax.random.uniform(kb, (num_classes,), jnp.float32, -bound, bound)
        wm = jax.random.normal(km, (num_classes, dim), dtype=jnp.float32) * 0.5
        return x, w_fn, b_fn, wm

    def check(name, args, **kw):
        try:
            out, wm_new = compression_forward(*args, **kw)
        except Exception:
            # Fallback if this jax build rejects single-buffered invariant blocks.
            out, wm_new = compression_forward(*args, single_buffer_weights=False, **kw)
        jax.block_until_ready((out, wm_new))
        out_ref, wm_ref = compression_reference(*args)
        # bf16 MXU operands -> slightly looser tolerance than pure f32.
        assert jnp.allclose(out, out_ref, atol=1e-4, rtol=1e-4), f"{name}: out mismatch"
        assert jnp.allclose(wm_new, wm_ref, atol=2e-3, rtol=5e-2), f"{name}: weighted_means mismatch"

    k1, k2 = jax.random.split(key)

    # Test 1: module-like small shapes (batch=8, dim=32, classes=8) — exercises
    # the padded-D fallback; weighted_means starts as the zero buffer.
    x, w_fn, b_fn, wm = make_inputs(k1, 8, 32, 8)
    wm = jnp.zeros_like(wm)   # register_buffer('weighted_means', torch.zeros(...))
    check("padded-D", (x, w_fn, b_fn, wm))

    # Test 2: 128-aligned D (no pad/copy of X), ragged N handled in-kernel,
    # 2-way stats split, small forced tile to exercise multi-tile accumulation.
    check("aligned-D", make_inputs(k2, 203, 128, 16), tile_n=64)

    print("KERNEL_OK")
</pallas_src>

<mosaic_0001>
module attributes {stable_mosaic.version = 11 : i64} {
  func.func @_apply_kernel(%arg0: i32, %arg1: memref<8x128xf32, #tpu.memory_space<vmem>>, %arg2: memref<128x128xbf16, #tpu.memory_space<vmem>>, %arg3: memref<1x128xf32, #tpu.memory_space<vmem>>, %arg4: memref<128x128xbf16, #tpu.memory_space<vmem>>, %arg5: memref<8x128xf32, #tpu.memory_space<vmem>>) attributes {dimension_semantics = [#tpu.dimension_semantics<parallel>], iteration_bounds = array<i64: 1>, scalar_prefetch = 0 : i64, scratch_operands = 0 : i64, tpu.core_type = #tpu.core_type<tc>, window_params = [{transform_indices = @transform_0, window_bounds = array<i64: 8, 128>}, {pipeline_mode = #tpu.pipeline_mode<synchronous>, transform_indices = @transform_1, window_bounds = array<i64: 128, 128>}, {pipeline_mode = #tpu.pipeline_mode<synchronous>, transform_indices = @transform_2, window_bounds = array<i64: 1, 128>}, {pipeline_mode = #tpu.pipeline_mode<synchronous>, transform_indices = @transform_3, window_bounds = array<i64: 128, 128>}, {transform_indices = @transform_4, window_bounds = array<i64: 8, 128>}]} {
    %c0 = arith.constant 0 : index
    %c0_0 = arith.constant 0 : index
    %0 = vector.load %arg1[%c0, %c0_0] : memref<8x128xf32, #tpu.memory_space<vmem>>, vector<8x128xf32>
    %1 = arith.truncf %0 : vector<8x128xf32> to vector<8x128xbf16>
    %c0_1 = arith.constant 0 : index
    %c0_2 = arith.constant 0 : index
    %2 = vector.load %arg2[%c0_1, %c0_2] : memref<128x128xbf16, #tpu.memory_space<vmem>>, vector<128x128xbf16>
    %cst = arith.constant dense<0.000000e+00> : vector<8x128xf32>
    %3 = tpu.matmul %1, %2, %cst {dimension_numbers = #tpu.dot_dimension_numbers<[1], [1], [0], [0], [0, 0, 1, 0], [], []>} : vector<8x128xbf16>, vector<128x128xbf16>, vector<8x128xf32> -> vector<8x128xf32>
    %c0_3 = arith.constant 0 : index
    %c0_4 = arith.constant 0 : index
    %4 = vector.load %arg3[%c0_3, %c0_4] : memref<1x128xf32, #tpu.memory_space<vmem>>, vector<1x128xf32>
    %5 = vector.broadcast %4 : vector<1x128xf32> to vector<8x128xf32>
    %6 = arith.addf %3, %5 : vector<8x128xf32>
    %cst_5 = arith.constant dense<0xFF800000> : vector<8xf32>
    %7 = vector.multi_reduction <maximumf>, %6, %cst_5 [1] : vector<8x128xf32> to vector<8xf32>
    %8 = vector.shape_cast %7 : vector<8xf32> to vector<8x1xf32>
    %9 = vector.broadcast %8 : vector<8x1xf32> to vector<8x128xf32>
    %10 = arith.subf %6, %9 : vector<8x128xf32>
    %11 = math.exp %10 : vector<8x128xf32>
    %cst_6 = arith.constant dense<0.000000e+00> : vector<8xf32>
    %12 = vector.multi_reduction <add>, %11, %cst_6 [1] : vector<8x128xf32> to vector<8xf32>
    %13 = vector.shape_cast %12 : vector<8xf32> to vector<8x1xf32>
    %14 = tpu.reciprocal %13 {approx = true} : vector<8x1xf32> -> vector<8x1xf32>
    %15 = vector.broadcast %14 : vector<8x1xf32> to vector<8x128xf32>
    %16 = arith.mulf %11, %15 : vector<8x128xf32>
    %cst_7 = arith.constant 9.99999974E-5 : f32
    %17 = vector.broadcast %cst_7 : f32 to vector<8x128xf32>
    %18 = arith.mulf %16, %17 : vector<8x128xf32>
    %19 = arith.truncf %18 : vector<8x128xf32> to vector<8x128xbf16>
    %c0_8 = arith.constant 0 : index
    %c0_9 = arith.constant 0 : index
    %20 = vector.load %arg4[%c0_8, %c0_9] : memref<128x128xbf16, #tpu.memory_space<vmem>>, vector<128x128xbf16>
    %cst_10 = arith.constant dense<0.000000e+00> : vector<8x128xf32>
    %21 = tpu.matmul %19, %20, %cst_10 {dimension_numbers = #tpu.dot_dimension_numbers<[1], [0], [0], [1], [0, 0, 1, 1], [], []>} : vector<8x128xbf16>, vector<128x128xbf16>, vector<8x128xf32> -> vector<8x128xf32>
    %22 = arith.addf %0, %21 : vector<8x128xf32>
    %c0_11 = arith.constant 0 : index
    %c0_12 = arith.constant 0 : index
    %23 = vector.load %arg5[%c0_11, %c0_12] : memref<8x128xf32, #tpu.memory_space<vmem>>, vector<8x128xf32>
    tpu.vector_store %arg5[%c0_11, %c0_12], %22 {strides = array<i32>} : memref<8x128xf32, #tpu.memory_space<vmem>>, vector<8x128xf32>,
    return
  }
  func.func @transform_0(%arg0: i32) -> (i32, i32) {
    %c0_i32 = arith.constant 0 : i32
    %c0_i32_0 = arith.constant 0 : i32
    return %arg0, %c0_i32 : i32, i32
  }
  func.func @transform_1(%arg0: i32) -> (i32, i32) {
    %c0_i32 = arith.constant 0 : i32
    %c0_i32_0 = arith.constant 0 : i32
    %c0_i32_1 = arith.constant 0 : i32
    return %c0_i32, %c0_i32_0 : i32, i32
  }
  func.func @transform_2(%arg0: i32) -> (i32, i32) {
    %c0_i32 = arith.constant 0 : i32
    %c0_i32_0 = arith.constant 0 : i32
    %c0_i32_1 = arith.constant 0 : i32
    return %c0_i32, %c0_i32_0 : i32, i32
  }
  func.func @transform_3(%arg0: i32) -> (i32, i32) {
    %c0_i32 = arith.constant 0 : i32
    %c0_i32_0 = arith.constant 0 : i32
    %c0_i32_1 = arith.constant 0 : i32
    return %c0_i32, %c0_i32_0 : i32, i32
  }
  func.func @transform_4(%arg0: i32) -> (i32, i32) {
    %c0_i32 = arith.constant 0 : i32
    %c0_i32_0 = arith.constant 0 : i32
    return %arg0, %c0_i32 : i32, i32
  }
}

module attributes {stable_mosaic.version = 11 : i64} {
  func.func @_stats_kernel(%arg0: i32, %arg1: i32, %arg2: memref<8x128xf32, #tpu.memory_space<vmem>>, %arg3: memref<128x128xbf16, #tpu.memory_space<vmem>>, %arg4: memref<1x128xf32, #tpu.memory_space<vmem>>, %arg5: memref<1x128x128xf32, #tpu.memory_space<vmem>>) attributes {dimension_semantics = [#tpu.dimension_semantics<parallel>, #tpu.dimension_semantics<arbitrary>], iteration_bounds = array<i64: 1, 1>, scalar_prefetch = 0 : i64, scratch_operands = 0 : i64, tpu.core_type = #tpu.core_type<tc>, window_params = [{transform_indices = @transform_0, window_bounds = array<i64: 8, 128>}, {pipeline_mode = #tpu.pipeline_mode<synchronous>, transform_indices = @transform_1, window_bounds = array<i64: 128, 128>}, {pipeline_mode = #tpu.pipeline_mode<synchronous>, transform_indices = @transform_2, window_bounds = array<i64: 1, 128>}, {transform_indices = @transform_3, window_bounds = array<i64: 1, 128, 128>}]} {
    %c0_i32 = arith.constant 0 : i32
    %0 = arith.cmpi eq, %arg1, %c0_i32 : i32
    %1 = arith.extui %0 : i1 to i32
    %c0_i32_0 = arith.constant 0 : i32
    %2 = arith.cmpi ne, %1, %c0_i32_0 : i32
    scf.if %2 {
      %cst_18 = arith.constant 0.000000e+00 : f32
      %44 = vector.broadcast %cst_18 : f32 to vector<1x128x128xf32>
      %c0_19 = arith.constant 0 : index
      %c0_20 = arith.constant 0 : index
      %c0_21 = arith.constant 0 : index
      %45 = vector.load %arg5[%c0_19, %c0_20, %c0_21] : memref<1x128x128xf32, #tpu.memory_space<vmem>>, vector<1x128x128xf32>
      tpu.vector_store %arg5[%c0_19, %c0_20, %c0_21], %44 {strides = array<i32>} : memref<1x128x128xf32, #tpu.memory_space<vmem>>, vector<1x128x128xf32>,
    } else {
    }
    %c1_i32 = arith.constant 1 : i32
    %3 = arith.muli %arg0, %c1_i32 : i32
    %4 = arith.addi %3, %arg1 : i32
    %c8_i32 = arith.constant 8 : i32
    %5 = arith.muli %4, %c8_i32 : i32
    %6 = tpu.iota {dimensions = array<i32: 0>} : vector<8x1xi32>
    %7 = vector.broadcast %5 : i32 to vector<8x1xi32>
    %8 = arith.addi %7, %6 : vector<8x1xi32>
    %c8_i32_1 = arith.constant 8 : i32
    %9 = vector.broadcast %c8_i32_1 : i32 to vector<8x1xi32>
    %10 = arith.cmpi slt, %8, %9 : vector<8x1xi32>
    %c0 = arith.constant 0 : index
    %c0_2 = arith.constant 0 : index
    %11 = vector.load %arg2[%c0, %c0_2] : memref<8x128xf32, #tpu.memory_space<vmem>>, vector<8x128xf32>
    %c0_i32_3 = arith.constant 0 : i32
    %12 = arith.sitofp %c0_i32_3 : i32 to f32
    %13 = vector.shape_cast %10 : vector<8x1xi1> to vector<8x1xi1>
    %14 = vector.broadcast %13 : vector<8x1xi1> to vector<8x128xi1>
    %15 = vector.broadcast %12 : f32 to vector<8x128xf32>
    %16 = arith.select %14, %11, %15 : vector<8x128xi1>, vector<8x128xf32>
    %17 = arith.truncf %16 : vector<8x128xf32> to vector<8x128xbf16>
    %c0_4 = arith.constant 0 : index
    %c0_5 = arith.constant 0 : index
    %18 = vector.load %arg3[%c0_4, %c0_5] : memref<128x128xbf16, #tpu.memory_space<vmem>>, vector<128x128xbf16>
    %cst = arith.constant dense<0.000000e+00> : vector<8x128xf32>
    %19 = tpu.matmul %17, %18, %cst {dimension_numbers = #tpu.dot_dimension_numbers<[1], [1], [0], [0], [0, 0, 1, 0], [], []>} : vector<8x128xbf16>, vector<128x128xbf16>, vector<8x128xf32> -> vector<8x128xf32>
    %c0_6 = arith.constant 0 : index
    %c0_7 = arith.constant 0 : index
    %20 = vector.load %arg4[%c0_6, %c0_7] : memref<1x128xf32, #tpu.memory_space<vmem>>, vector<1x128xf32>
    %21 = vector.broadcast %20 : vector<1x128xf32> to vector<8x128xf32>
    %22 = arith.addf %19, %21 : vector<8x128xf32>
    %cst_8 = arith.constant dense<0xFF800000> : vector<8xf32>
    %23 = vector.multi_reduction <maximumf>, %22, %cst_8 [1] : vector<8x128xf32> to vector<8xf32>
    %24 = vector.shape_cast %23 : vector<8xf32> to vector<8x1xf32>
    %25 = vector.broadcast %24 : vector<8x1xf32> to vector<8x128xf32>
    %26 = arith.subf %22, %25 : vector<8x128xf32>
    %27 = math.exp %26 : vector<8x128xf32>
    %cst_9 = arith.constant dense<0.000000e+00> : vector<8xf32>
    %28 = vector.multi_reduction <add>, %27, %cst_9 [1] : vector<8x128xf32> to vector<8xf32>
    %29 = vector.shape_cast %28 : vector<8xf32> to vector<8x1xf32>
    %30 = vector.broadcast %29 : vector<8x1xf32> to vector<8x128xf32>
    %31 = arith.divf %27, %30 : vector<8x128xf32>
    %cst_10 = arith.constant 0.000000e+00 : f32
    %32 = vector.shape_cast %10 : vector<8x1xi1> to vector<8x1xi1>
    %33 = vector.broadcast %32 : vector<8x1xi1> to vector<8x128xi1>
    %34 = vector.broadcast %cst_10 : f32 to vector<8x128xf32>
    %35 = arith.select %33, %31, %34 : vector<8x128xi1>, vector<8x128xf32>
    %36 = arith.truncf %35 : vector<8x128xf32> to vector<8x128xbf16>
    %c0_11 = arith.constant 0 : index
    %c0_12 = arith.constant 0 : index
    %c0_13 = arith.constant 0 : index
    %37 = vector.load %arg5[%c0_11, %c0_12, %c0_13] : memref<1x128x128xf32, #tpu.memory_space<vmem>>, vector<1x128x128xf32>
    %38 = vector.shape_cast %37 : vector<1x128x128xf32> to vector<128x128xf32>
    %cst_14 = arith.constant dense<0.000000e+00> : vector<128x128xf32>
    %39 = tpu.matmul %36, %17, %cst_14 {dimension_numbers = #tpu.dot_dimension_numbers<[0], [0], [1], [1], [0, 1, 1, 1], [], []>} : vector<8x128xbf16>, vector<8x128xbf16>, vector<128x128xf32> -> vector<128x128xf32>
    %40 = arith.addf %38, %39 : vector<128x128xf32>
    %c0_15 = arith.constant 0 : index
    %c0_16 = arith.constant 0 : index
    %c0_17 = arith.constant 0 : index
    %41 = vector.load %arg5[%c0_15, %c0_16, %c0_17] : memref<1x128x128xf32, #tpu.memory_space<vmem>>, vector<1x128x128xf32>
    %42 = vector.shape_cast %41 : vector<1x128x128xf32> to vector<128x128xf32>
    %43 = vector.shape_cast %40 : vector<128x128xf32> to vector<1x128x128xf32>
    tpu.vector_store %arg5[%c0_15, %c0_16, %c0_17], %43 {strides = array<i32>} : memref<1x128x128xf32, #tpu.memory_space<vmem>>, vector<1x128x128xf32>,
    return
  }
  func.func @transform_0(%arg0: i32, %arg1: i32) -> (i32, i32) {
    %c1_i32 = arith.constant 1 : i32
    %0 = arith.muli %arg0, %c1_i32 : i32
    %1 = arith.addi %0, %arg1 : i32
    %c0_i32 = arith.constant 0 : i32
    %2 = arith.minsi %1, %c0_i32 : i32
    %c0_i32_0 = arith.constant 0 : i32
    %c0_i32_1 = arith.constant 0 : i32
    return %2, %c0_i32_0 : i32, i32
  }
  func.func @transform_1(%arg0: i32, %arg1: i32) -> (i32, i32) {
    %c0_i32 = arith.constant 0 : i32
    %c0_i32_0 = arith.constant 0 : i32
    %c0_i32_1 = arith.constant 0 : i32
    return %c0_i32, %c0_i32_0 : i32, i32
  }
  func.func @transform_2(%arg0: i32, %arg1: i32) -> (i32, i32) {
    %c0_i32 = arith.constant 0 : i32
    %c0_i32_0 = arith.constant 0 : i32
    %c0_i32_1 = arith.constant 0 : i32
    return %c0_i32, %c0_i32_0 : i32, i32
  }
  func.func @transform_3(%arg0: i32, %arg1: i32) -> (i32, i32, i32) {
    %c0_i32 = arith.constant 0 : i32
    %c0_i32_0 = arith.constant 0 : i32
    %c0_i32_1 = arith.constant 0 : i32
    return %arg0, %c0_i32, %c0_i32_0 : i32, i32, i32
  }
}

module attributes {stable_mosaic.version = 11 : i64} {
  func.func @_stats_kernel(%arg0: i32, %arg1: i32, %arg2: memref<8x128xf32, #tpu.memory_space<vmem>>, %arg3: memref<128x128xbf16, #tpu.memory_space<vmem>>, %arg4: memref<1x128xf32, #tpu.memory_space<vmem>>, %arg5: memref<1x128x128xf32, #tpu.memory_space<vmem>>) attributes {dimension_semantics = [#tpu.dimension_semantics<parallel>, #tpu.dimension_semantics<arbitrary>], iteration_bounds = array<i64: 1, 1>, scalar_prefetch = 0 : i64, scratch_operands = 0 : i64, tpu.core_type = #tpu.core_type<tc>, window_params = [{transform_indices = @transform_0, window_bounds = array<i64: 8, 128>}, {pipeline_mode = #tpu.pipeline_mode<synchronous>, transform_indices = @transform_1, window_bounds = array<i64: 128, 128>}, {pipeline_mode = #tpu.pipeline_mode<synchronous>, transform_indices = @transform_2, window_bounds = array<i64: 1, 128>}, {transform_indices = @transform_3, window_bounds = array<i64: 1, 128, 128>}]} {
    %c0_i32 = arith.constant 0 : i32
    %0 = arith.cmpi eq, %arg1, %c0_i32 : i32
    %1 = arith.extui %0 : i1 to i32
    %c0_i32_0 = arith.constant 0 : i32
    %2 = arith.cmpi ne, %1, %c0_i32_0 : i32
    scf.if %2 {
      %cst_18 = arith.constant 0.000000e+00 : f32
      %44 = vector.broadcast %cst_18 : f32 to vector<1x128x128xf32>
      %c0_19 = arith.constant 0 : index
      %c0_20 = arith.constant 0 : index
      %c0_21 = arith.constant 0 : index
      %45 = vector.load %arg5[%c0_19, %c0_20, %c0_21] : memref<1x128x128xf32, #tpu.memory_space<vmem>>, vector<1x128x128xf32>
      tpu.vector_store %arg5[%c0_19, %c0_20, %c0_21], %44 {strides = array<i32>} : memref<1x128x128xf32, #tpu.memory_space<vmem>>, vector<1x128x128xf32>,
    } else {
    }
    %c1_i32 = arith.constant 1 : i32
    %3 = arith.muli %arg0, %c1_i32 : i32
    %4 = arith.addi %3, %arg1 : i32
    %c8_i32 = arith.constant 8 : i32
    %5 = arith.muli %4, %c8_i32 : i32
    %6 = tpu.iota {dimensions = array<i32: 0>} : vector<8x1xi32>
    %7 = vector.broadcast %5 : i32 to vector<8x1xi32>
    %8 = arith.addi %7, %6 : vector<8x1xi32>
    %c8_i32_1 = arith.constant 8 : i32
    %9 = vector.broadcast %c8_i32_1 : i32 to vector<8x1xi32>
    %10 = arith.cmpi slt, %8, %9 : vector<8x1xi32>
    %c0 = arith.constant 0 : index
    %c0_2 = arith.constant 0 : index
    %11 = vector.load %arg2[%c0, %c0_2] : memref<8x128xf32, #tpu.memory_space<vmem>>, vector<8x128xf32>
    %c0_i32_3 = arith.constant 0 : i32
    %12 = arith.sitofp %c0_i32_3 : i32 to f32
    %13 = vector.shape_cast %10 : vector<8x1xi1> to vector<8x1xi1>
    %14 = vector.broadcast %13 : vector<8x1xi1> to vector<8x128xi1>
    %15 = vector.broadcast %12 : f32 to vector<8x128xf32>
    %16 = arith.select %14, %11, %15 : vector<8x128xi1>, vector<8x128xf32>
    %17 = arith.truncf %16 : vector<8x128xf32> to vector<8x128xbf16>
    %c0_4 = arith.constant 0 : index
    %c0_5 = arith.constant 0 : index
    %18 = vector.load %arg3[%c0_4, %c0_5] : memref<128x128xbf16, #tpu.memory_space<vmem>>, vector<128x128xbf16>
    %cst = arith.constant dense<0.000000e+00> : vector<8x128xf32>
    %19 = tpu.matmul %17, %18, %cst {dimension_numbers = #tpu.dot_dimension_numbers<[1], [1], [0], [0], [0, 0, 1, 0], [], []>} : vector<8x128xbf16>, vector<128x128xbf16>, vector<8x128xf32> -> vector<8x128xf32>
    %c0_6 = arith.constant 0 : index
    %c0_7 = arith.constant 0 : index
    %20 = vector.load %arg4[%c0_6, %c0_7] : memref<1x128xf32, #tpu.memory_space<vmem>>, vector<1x128xf32>
    %21 = vector.broadcast %20 : vector<1x128xf32> to vector<8x128xf32>
    %22 = arith.addf %19, %21 : vector<8x128xf32>
    %cst_8 = arith.constant dense<0xFF800000> : vector<8xf32>
    %23 = vector.multi_reduction <maximumf>, %22, %cst_8 [1] : vector<8x128xf32> to vector<8xf32>
    %24 = vector.shape_cast %23 : vector<8xf32> to vector<8x1xf32>
    %25 = vector.broadcast %24 : vector<8x1xf32> to vector<8x128xf32>
    %26 = arith.subf %22, %25 : vector<8x128xf32>
    %27 = math.exp %26 : vector<8x128xf32>
    %cst_9 = arith.constant dense<0.000000e+00> : vector<8xf32>
    %28 = vector.multi_reduction <add>, %27, %cst_9 [1] : vector<8x128xf32> to vector<8xf32>
    %29 = vector.shape_cast %28 : vector<8xf32> to vector<8x1xf32>
    %30 = vector.broadcast %29 : vector<8x1xf32> to vector<8x128xf32>
    %31 = arith.divf %27, %30 : vector<8x128xf32>
    %cst_10 = arith.constant 0.000000e+00 : f32
    %32 = vector.shape_cast %10 : vector<8x1xi1> to vector<8x1xi1>
    %33 = vector.broadcast %32 : vector<8x1xi1> to vector<8x128xi1>
    %34 = vector.broadcast %cst_10 : f32 to vector<8x128xf32>
    %35 = arith.select %33, %31, %34 : vector<8x128xi1>, vector<8x128xf32>
    %36 = arith.truncf %35 : vector<8x128xf32> to vector<8x128xbf16>
    %c0_11 = arith.constant 0 : index
    %c0_12 = arith.constant 0 : index
    %c0_13 = arith.constant 0 : index
    %37 = vector.load %arg5[%c0_11, %c0_12, %c0_13] : memref<1x128x128xf32, #tpu.memory_space<vmem>>, vector<1x128x128xf32>
    %38 = vector.shape_cast %37 : vector<1x128x128xf32> to vector<128x128xf32>
    %cst_14 = arith.constant dense<0.000000e+00> : vector<128x128xf32>
    %39 = tpu.matmul %36, %17, %cst_14 {dimension_numbers = #tpu.dot_dimension_numbers<[0], [0], [1], [1], [0, 1, 1, 1], [], []>} : vector<8x128xbf16>, vector<8x128xbf16>, vector<128x128xf32> -> vector<128x128xf32>
    %40 = arith.addf %38, %39 : vector<128x128xf32>
    %c0_15 = arith.constant 0 : index
    %c0_16 = arith.constant 0 : index
    %c0_17 = arith.constant 0 : index
    %41 = vector.load %arg5[%c0_15, %c0_16, %c0_17] : memref<1x128x128xf32, #tpu.memory_space<vmem>>, vector<1x128x128xf32>
    %42 = vector.shape_cast %41 : vector<1x128x128xf32> to vector<128x128xf32>
    %43 = vector.shape_cast %40 : vector<128x128xf32> to vector<1x128x128xf32>
    tpu.vector_store %arg5[%c0_15, %c0_16, %c0_17], %43 {strides = array<i32>} : memref<1x128x128xf32, #tpu.memory_space<vmem>>, vector<1x128x128xf32>,
    return
  }
  func.func @transform_0(%arg0: i32, %arg1: i32) -> (i32, i32) {
    %c1_i32 = arith.constant 1 : i32
    %0 = arith.muli %arg0, %c1_i32 : i32
    %1 = arith.addi %0, %arg1 : i32
    %c0_i32 = arith.constant 0 : i32
    %2 = arith.minsi %1, %c0_i32 : i32
    %c0_i32_0 = arith.constant 0 : i32
    %c0_i32_1 = arith.constant 0 : i32
    return %2, %c0_i32_0 : i32, i32
  }
  func.func @transform_1(%arg0: i32, %arg1: i32) -> (i32, i32) {
    %c0_i32 = arith.constant 0 : i32
    %c0_i32_0 = arith.constant 0 : i32
    %c0_i32_1 = arith.constant 0 : i32
    return %c0_i32, %c0_i32_0 : i32, i32
  }
  func.func @transform_2(%arg0: i32, %arg1: i32) -> (i32, i32) {
    %c0_i32 = arith.constant 0 : i32
    %c0_i32_0 = arith.constant 0 : i32
    %c0_i32_1 = arith.constant 0 : i32
    return %c0_i32, %c0_i32_0 : i32, i32
  }
  func.func @transform_3(%arg0: i32, %arg1: i32) -> (i32, i32, i32) {
    %c0_i32 = arith.constant 0 : i32
    %c0_i32_0 = arith.constant 0 : i32
    %c0_i32_1 = arith.constant 0 : i32
    return %arg0, %c0_i32, %c0_i32_0 : i32, i32, i32
  }
}

module attributes {stable_mosaic.version = 11 : i64} {
  func.func @_apply_kernel(%arg0: i32, %arg1: memref<8x128xf32, #tpu.memory_space<vmem>>, %arg2: memref<128x128xbf16, #tpu.memory_space<vmem>>, %arg3: memref<1x128xf32, #tpu.memory_space<vmem>>, %arg4: memref<128x128xbf16, #tpu.memory_space<vmem>>, %arg5: memref<8x128xf32, #tpu.memory_space<vmem>>) attributes {dimension_semantics = [#tpu.dimension_semantics<parallel>], iteration_bounds = array<i64: 1>, scalar_prefetch = 0 : i64, scratch_operands = 0 : i64, tpu.core_type = #tpu.core_type<tc>, window_params = [{transform_indices = @transform_0, window_bounds = array<i64: 8, 128>}, {pipeline_mode = #tpu.pipeline_mode<synchronous>, transform_indices = @transform_1, window_bounds = array<i64: 128, 128>}, {pipeline_mode = #tpu.pipeline_mode<synchronous>, transform_indices = @transform_2, window_bounds = array<i64: 1, 128>}, {pipeline_mode = #tpu.pipeline_mode<synchronous>, transform_indices = @transform_3, window_bounds = array<i64: 128, 128>}, {transform_indices = @transform_4, window_bounds = array<i64: 8, 128>}]} {
    %c0 = arith.constant 0 : index
    %c0_0 = arith.constant 0 : index
    %0 = vector.load %arg1[%c0, %c0_0] : memref<8x128xf32, #tpu.memory_space<vmem>>, vector<8x128xf32>
    %1 = arith.truncf %0 : vector<8x128xf32> to vector<8x128xbf16>
    %c0_1 = arith.constant 0 : index
    %c0_2 = arith.constant 0 : index
    %2 = vector.load %arg2[%c0_1, %c0_2] : memref<128x128xbf16, #tpu.memory_space<vmem>>, vector<128x128xbf16>
    %cst = arith.constant dense<0.000000e+00> : vector<8x128xf32>
    %3 = tpu.matmul %1, %2, %cst {dimension_numbers = #tpu.dot_dimension_numbers<[1], [1], [0], [0], [0, 0, 1, 0], [], []>} : vector<8x128xbf16>, vector<128x128xbf16>, vector<8x128xf32> -> vector<8x128xf32>
    %c0_3 = arith.constant 0 : index
    %c0_4 = arith.constant 0 : index
    %4 = vector.load %arg3[%c0_3, %c0_4] : memref<1x128xf32, #tpu.memory_space<vmem>>, vector<1x128xf32>
    %5 = vector.broadcast %4 : vector<1x128xf32> to vector<8x128xf32>
    %6 = arith.addf %3, %5 : vector<8x128xf32>
    %cst_5 = arith.constant dense<0xFF800000> : vector<8xf32>
    %7 = vector.multi_reduction <maximumf>, %6, %cst_5 [1] : vector<8x128xf32> to vector<8xf32>
    %8 = vector.shape_cast %7 : vector<8xf32> to vector<8x1xf32>
    %9 = vector.broadcast %8 : vector<8x1xf32> to vector<8x128xf32>
    %10 = arith.subf %6, %9 : vector<8x128xf32>
    %11 = math.exp %10 : vector<8x128xf32>
    %cst_6 = arith.constant dense<0.000000e+00> : vector<8xf32>
    %12 = vector.multi_reduction <add>, %11, %cst_6 [1] : vector<8x128xf32> to vector<8xf32>
    %13 = vector.shape_cast %12 : vector<8xf32> to vector<8x1xf32>
    %14 = tpu.reciprocal %13 {approx = true} : vector<8x1xf32> -> vector<8x1xf32>
    %15 = vector.broadcast %14 : vector<8x1xf32> to vector<8x128xf32>
    %16 = arith.mulf %11, %15 : vector<8x128xf32>
    %cst_7 = arith.constant 9.99999974E-5 : f32
    %17 = vector.broadcast %cst_7 : f32 to vector<8x128xf32>
    %18 = arith.mulf %16, %17 : vector<8x128xf32>
    %19 = arith.truncf %18 : vector<8x128xf32> to vector<8x128xbf16>
    %c0_8 = arith.constant 0 : index
    %c0_9 = arith.constant 0 : index
    %20 = vector.load %arg4[%c0_8, %c0_9] : memref<128x128xbf16, #tpu.memory_space<vmem>>, vector<128x128xbf16>
    %cst_10 = arith.constant dense<0.000000e+00> : vector<8x128xf32>
    %21 = tpu.matmul %19, %20, %cst_10 {dimension_numbers = #tpu.dot_dimension_numbers<[1], [0], [0], [1], [0, 0, 1, 1], [], []>} : vector<8x128xbf16>, vector<128x128xbf16>, vector<8x128xf32> -> vector<8x128xf32>
    %22 = arith.addf %0, %21 : vector<8x128xf32>
    %c0_11 = arith.constant 0 : index
    %c0_12 = arith.constant 0 : index
    %23 = vector.load %arg5[%c0_11, %c0_12] : memref<8x128xf32, #tpu.memory_space<vmem>>, vector<8x128xf32>
    tpu.vector_store %arg5[%c0_11, %c0_12], %22 {strides = array<i32>} : memref<8x128xf32, #tpu.memory_space<vmem>>, vector<8x128xf32>,
    return
  }
  func.func @transform_0(%arg0: i32) -> (i32, i32) {
    %c0_i32 = arith.constant 0 : i32
    %c0_i32_0 = arith.constant 0 : i32
    return %arg0, %c0_i32 : i32, i32
  }
  func.func @transform_1(%arg0: i32) -> (i32, i32) {
    %c0_i32 = arith.constant 0 : i32
    %c0_i32_0 = arith.constant 0 : i32
    %c0_i32_1 = arith.constant 0 : i32
    return %c0_i32, %c0_i32_0 : i32, i32
  }
  func.func @transform_2(%arg0: i32) -> (i32, i32) {
    %c0_i32 = arith.constant 0 : i32
    %c0_i32_0 = arith.constant 0 : i32
    %c0_i32_1 = arith.constant 0 : i32
    return %c0_i32, %c0_i32_0 : i32, i32
  }
  func.func @transform_3(%arg0: i32) -> (i32, i32) {
    %c0_i32 = arith.constant 0 : i32
    %c0_i32_0 = arith.constant 0 : i32
    %c0_i32_1 = arith.constant 0 : i32
    return %c0_i32, %c0_i32_0 : i32, i32
  }
  func.func @transform_4(%arg0: i32) -> (i32, i32) {
    %c0_i32 = arith.constant 0 : i32
    %c0_i32_0 = arith.constant 0 : i32
    return %arg0, %c0_i32 : i32, i32
  }
}

</mosaic_0001>

<llo_original>
// kernel: compression_forward.3
$region0: #{compression_forward.3}
  #allocation0 [shape = 'u32[]', space=smem, size = 0x4, offset = 0x4, fixed_abs, tag = 'smem constant byte address 0x4 - core index']
  #allocation1 [shape = 'u32[144,128]{1,0:T(1,128)}', space=vmem, size = 0x12000, scoped, tag = 'internal scratch']
  %s0 = inlined_call_operand.vmem [shape: f32[8,128], index: 0, kind: input, shape index: {}]
  %s1 = inlined_call_operand.vmem [shape: bf16[128,128], index: 1, kind: input, shape index: {}]
  %s2 = inlined_call_operand.vmem [shape: f32[1,128], index: 2, kind: input, shape index: {}]
  %s3 = inlined_call_operand.vmem [shape: bf16[128,128], index: 3, kind: input, shape index: {}]
  %s4 = inlined_call_operand.hbm [shape: f32[8,128], index: 4, kind: output, shape index: {}]
  %s5 = sld [smem:[#allocation0]]
  $region26: #{compression_forward.3} parent=0
    _
  %s7 = ssub.s32 1, %s5
  %s8 = scalar_select 0, %s7, %s5
  $region1: #{compression_forward.3} parent=0
    #allocation2 [shape = 'u8[4096]{0}', space=vmem, size = 0x1000, scoped, tag = 'output window, operand 0, single buffered']
    #allocation3 [shape = 's32[1]{0}', space=sflag, size = 0x4, scoped, tag = 'scoped memory for compression_forward.3']
    %9 = vsyncpa [#allocation3], 0
    // Predicated region
    $region2: #{compression_forward.3} parent=1 // pred_check
      _
    $region3: #{compression_forward.3} parent=1 // pred_check_branch
      %11 = sbr.rel (0) target = $region5
    $region4: #{compression_forward.3} parent=1 // pred_region
      _
    $region5: #{compression_forward.3} parent=1 // pred_fallthru
      _
    // Predicated region
    $region6: #{compression_forward.3} parent=1 // pred_check
      _
    $region7: #{compression_forward.3} parent=1 // pred_check_branch
      %13 = sbr.rel (0) target = $region9
    $region8: #{compression_forward.3} parent=1 // pred_region
      _
    $region9: #{compression_forward.3} parent=1 // pred_fallthru
      _
    // Predicated region
    $region10: #{compression_forward.3} parent=1 // pred_check
      _
    $region11: #{compression_forward.3} parent=1 // pred_check_branch
      %15 = sbr.rel (0) target = $region13
    $region12: #{compression_forward.3} parent=1 // pred_region
      _
    $region13: #{compression_forward.3} parent=1 // pred_fallthru
      _
    // Predicated region
    $region14: #{compression_forward.3} parent=1 // pred_check
      _
    $region15: #{compression_forward.3} parent=1 // pred_check_branch
      %17 = sbr.rel (0) target = $region17
    $region16: #{compression_forward.3} parent=1 // pred_region
      _
    $region17: #{compression_forward.3} parent=1 // pred_fallthru
      _
    %v19 = vld [vmem:[%s0] sm:$0xff]
    %v20 = vpack.c.bf16 %v19, %v19
    %v21 = vld [vmem:[%s1] sm:$0xf]
    %v22 = vld [vmem:[%s1 + $0x4] sm:$0xf]
    %v23 = vld [vmem:[%s1 + $0x8] sm:$0xf]
    %v24 = vld [vmem:[%s1 + $0xc] sm:$0xf]
    %v25 = vld [vmem:[%s1 + $0x10] sm:$0xf]
    %v26 = vld [vmem:[%s1 + $0x14] sm:$0xf]
    %v27 = vld [vmem:[%s1 + $0x18] sm:$0xf]
    %v28 = vld [vmem:[%s1 + $0x1c] sm:$0xf]
    %v29 = vld [vmem:[%s1 + $0x20] sm:$0xf]
    %v30 = vld [vmem:[%s1 + $0x24] sm:$0xf]
    %v31 = vld [vmem:[%s1 + $0x28] sm:$0xf]
    %v32 = vld [vmem:[%s1 + $0x2c] sm:$0xf]
    %v33 = vld [vmem:[%s1 + $0x30] sm:$0xf]
    %v34 = vld [vmem:[%s1 + $0x34] sm:$0xf]
    %v35 = vld [vmem:[%s1 + $0x38] sm:$0xf]
    %v36 = vld [vmem:[%s1 + $0x3c] sm:$0xf]
    %v37 = vld [vmem:[%s2] sm:$0x1]
    %v39 = vlaneseq
    %v40 = vshrl.u32 %v39, 7
    %v41 = vsub.s32 0, %v40
    %v42 = vrot.slane %v37, %v41
    %v60 = vunpack.c.l.b16 %v21
    %v61 = vunpack.c.l.b16 %v22
    %v62 = vunpack.c.l.b16 %v23
    %v63 = vunpack.c.l.b16 %v24
    %v64 = vunpack.c.l.b16 %v25
    %v65 = vunpack.c.l.b16 %v26
    %v66 = vunpack.c.l.b16 %v27
    %v67 = vunpack.c.l.b16 %v28
    %v68 = vunpack.c.l.b16 %v29
    %v69 = vunpack.c.l.b16 %v30
    %v70 = vunpack.c.l.b16 %v31
    %v71 = vunpack.c.l.b16 %v32
    %v72 = vunpack.c.l.b16 %v33
    %v73 = vunpack.c.l.b16 %v34
    %v74 = vunpack.c.l.b16 %v35
    %v75 = vunpack.c.l.b16 %v36
    %v76 = vpack.c.b16 %v61, %v60
    %v77 = vpack.c.b16 %v63, %v62
    %v78 = vpack.c.b16 %v65, %v64
    %v79 = vpack.c.b16 %v67, %v66
    %v80 = vpack.c.b16 %v69, %v68
    %v81 = vpack.c.b16 %v71, %v70
    %v82 = vpack.c.b16 %v73, %v72
    %v83 = vpack.c.b16 %v75, %v74
    %92 = vmatprep.subr.bf16.mxu0 0
    %93 = vmatpush1.bf16.xpose.msra.mxu0 %v76
    %94 = vmatprep.subr.bf16.mxu0 0
    %95 = vmatpush1.bf16.xpose.msra.mxu0 %v77
    %96 = vmatprep.subr.bf16.mxu0 0
    %97 = vmatpush1.bf16.xpose.msra.mxu0 %v78
    %98 = vmatprep.subr.bf16.mxu0 0
    %99 = vmatpush1.bf16.xpose.msra.mxu0 %v79
    %100 = vmatprep.subr.bf16.mxu0 0
    %101 = vmatpush1.bf16.xpose.msra.mxu0 %v80
    %102 = vmatprep.subr.bf16.mxu0 0
    %103 = vmatpush1.bf16.xpose.msra.mxu0 %v81
    %104 = vmatprep.subr.bf16.mxu0 0
    %105 = vmatpush1.bf16.xpose.msra.mxu0 %v82
    %106 = vmatprep.subr.bf16.mxu0 0
    %107 = vmatpush1.bf16.xpose.msra.mxu0 %v83
    %108 = vmatprep.subr.bf16.mxu0 0
    %109 = vmatpush1.bf16.xpose.msra.mxu0 0
    %110 = vmatprep.subr.bf16.mxu0 0
    %111 = vmatpush1.bf16.xpose.msra.mxu0 0
    %112 = vmatprep.subr.bf16.mxu0 0
    %113 = vmatpush1.bf16.xpose.msra.mxu0 0
    %114 = vmatprep.subr.bf16.mxu0 0
    %115 = vmatpush1.bf16.xpose.msra.mxu0 0
    %116 = vmatprep.subr.bf16.mxu0 0
    %117 = vmatpush1.bf16.xpose.msra.mxu0 0
    %118 = vmatprep.subr.bf16.mxu0 0
    %119 = vmatpush1.bf16.xpose.msra.mxu0 0
    %120 = vmatprep.subr.bf16.mxu0 0
    %121 = vmatpush1.bf16.xpose.msra.mxu0 0
    %122 = vmatprep.subr.bf16.mxu0 0
    %123 = vmatpush1.bf16.xpose.msra.mxu0 0
    %124 = vmatprep.mubr.bf16.mxu0 0
    %125 = vmatmul.mubr.bf16.gmra.mrb[0].mxu0 %v20
    %v126 = vpop.f32.mrb[0].mxu0
    %v127 = vadd.f32 %v42, %v126
    %v128 = vpop.f32.mrb[0].mxu0
    %v129 = vpop.f32.mrb[0].mxu0
    %v130 = vpop.f32.mrb[0].mxu0
    %131 = vdwg.mxu0
    %132 = vmax.xlane.f32.xlu0 %v127
    %v133 = vpop.xlane.xlu0 %132
    %v134 = vsub.f32 %v127, %v133
    %v135 = vmul.f32 %v134, 1.442695
    %v136 = vpow.pop %v135
    %137 = vadd.xlane.f32.xlu0 %v136
    %v138 = vpop.xlane.xlu0 %137
    %v139 = vrcp.pop %v138
    %v140 = vmul.f32 %v136, %v139
    %v141 = vmul.f32 %v140, 0.0001
    %v142 = vpack.c.bf16 %v141, %v141
    %v143 = vld [vmem:[%s3] sm:$0xf]
    %v144 = vld [vmem:[%s3 + $0x4] sm:$0xf]
    %v145 = vld [vmem:[%s3 + $0x8] sm:$0xf]
    %v146 = vld [vmem:[%s3 + $0xc] sm:$0xf]
    %v147 = vld [vmem:[%s3 + $0x10] sm:$0xf]
    %v148 = vld [vmem:[%s3 + $0x14] sm:$0xf]
    %v149 = vld [vmem:[%s3 + $0x18] sm:$0xf]
    %v150 = vld [vmem:[%s3 + $0x1c] sm:$0xf]
    %v151 = vld [vmem:[%s3 + $0x20] sm:$0xf]
    %v152 = vld [vmem:[%s3 + $0x24] sm:$0xf]
    %v153 = vld [vmem:[%s3 + $0x28] sm:$0xf]
    %v154 = vld [vmem:[%s3 + $0x2c] sm:$0xf]
    %v155 = vld [vmem:[%s3 + $0x30] sm:$0xf]
    %v156 = vld [vmem:[%s3 + $0x34] sm:$0xf]
    %v157 = vld [vmem:[%s3 + $0x38] sm:$0xf]
    %v158 = vld [vmem:[%s3 + $0x3c] sm:$0xf]
    %v175 = vunpack.c.l.b16 %v143
    %v176 = vunpack.c.l.b16 %v144
    %v177 = vunpack.c.l.b16 %v145
    %v178 = vunpack.c.l.b16 %v146
    %v179 = vunpack.c.l.b16 %v147
    %v180 = vunpack.c.l.b16 %v148
    %v181 = vunpack.c.l.b16 %v149
    %v182 = vunpack.c.l.b16 %v150
    %v183 = vunpack.c.l.b16 %v151
    %v184 = vunpack.c.l.b16 %v152
    %v185 = vunpack.c.l.b16 %v153
    %v186 = vunpack.c.l.b16 %v154
    %v187 = vunpack.c.l.b16 %v155
    %v188 = vunpack.c.l.b16 %v156
    %v189 = vunpack.c.l.b16 %v157
    %v190 = vunpack.c.l.b16 %v158
    %v191 = vpack.c.b16 %v176, %v175
    %v192 = vpack.c.b16 %v178, %v177
    %v193 = vpack.c.b16 %v180, %v179
    %v194 = vpack.c.b16 %v182, %v181
    %v195 = vpack.c.b16 %v184, %v183
    %v196 = vpack.c.b16 %v186, %v185
    %v197 = vpack.c.b16 %v188, %v187
    %v198 = vpack.c.b16 %v190, %v189
    %207 = vmatprep.subr.bf16.mxu0 0
    %208 = vmatpush1.bf16.msra.mxu0 %v191
    %209 = vmatprep.subr.bf16.mxu0 0
    %210 = vmatpush1.bf16.msra.mxu0 %v192
    %211 = vmatprep.subr.bf16.mxu0 0
    %212 = vmatpush1.bf16.msra.mxu0 %v193
    %213 = vmatprep.subr.bf16.mxu0 0
    %214 = vmatpush1.bf16.msra.mxu0 %v194
    %215 = vmatprep.subr.bf16.mxu0 0
    %216 = vmatpush1.bf16.msra.mxu0 %v195
    %217 = vmatprep.subr.bf16.mxu0 0
    %218 = vmatpush1.bf16.msra.mxu0 %v196
    %219 = vmatprep.subr.bf16.mxu0 0
    %220 = vmatpush1.bf16.msra.mxu0 %v197
    %221 = vmatprep.subr.bf16.mxu0 0
    %222 = vmatpush1.bf16.msra.mxu0 %v198
    %223 = vmatprep.subr.bf16.mxu0 0
    %224 = vmatpush1.bf16.msra.mxu0 0
    %225 = vmatprep.subr.bf16.mxu0 0
    %226 = vmatpush1.bf16.msra.mxu0 0
    %227 = vmatprep.subr.bf16.mxu0 0
    %228 = vmatpush1.bf16.msra.mxu0 0
    %229 = vmatprep.subr.bf16.mxu0 0
    %230 = vmatpush1.bf16.msra.mxu0 0
    %231 = vmatprep.subr.bf16.mxu0 0
    %232 = vmatpush1.bf16.msra.mxu0 0
    %233 = vmatprep.subr.bf16.mxu0 0
    %234 = vmatpush1.bf16.msra.mxu0 0
    %235 = vmatprep.subr.bf16.mxu0 0
    %236 = vmatpush1.bf16.msra.mxu0 0
    %237 = vmatprep.subr.bf16.mxu0 0
    %238 = vmatpush1.bf16.msra.mxu0 0
    %239 = vmatprep.mubr.bf16.mxu0 0
    %240 = vmatmul.mubr.bf16.gmra.mrb[0].mxu0 %v142
    %v241 = vpop.f32.mrb[0].mxu0
    %v242 = vadd.f32 0.0, %v241
    %v243 = vpop.f32.mrb[0].mxu0
    %v244 = vpop.f32.mrb[0].mxu0
    %v245 = vpop.f32.mrb[0].mxu0
    %246 = vdwg.mxu0
    %v247 = vadd.f32 %v19, %v242
    %248 = vst [vmem:[#allocation2] sm:$0xff] %v247
    // Predicated region
    $region18: #{compression_forward.3} parent=1 // pred_check
      _
    $region19: #{compression_forward.3} parent=1 // pred_check_branch
      %250 = sbr.rel (0) target = $region21
    $region20: #{compression_forward.3} parent=1 // pred_region
      %s252 = ssub.s32 128, 128
      %253 = vsyncadd [#allocation3], %s252
      %s255 = sshll.u32 [#allocation2], 4
      %s256 = int_to_ptr.vmem [resolvable:$true] %s255
      %258 = dma.vmem_to_hbm [thread:$0]  %s256, 128, %s4, [#allocation3]
    $region21: #{compression_forward.3} parent=1 // pred_fallthru
      _
    // Predicated region
    $region22: #{compression_forward.3} parent=1 // pred_check
      _
    $region23: #{compression_forward.3} parent=1 // pred_check_branch
      %260 = sbr.rel (0) target = $region25
    $region24: #{compression_forward.3} parent=1 // pred_region
      %261 = dma.done [#allocation3], 128
    $region25: #{compression_forward.3} parent=1 // pred_fallthru
      _
    %262 = vsyncpa [#allocation3], 1

// kernel: compression_forward.2
$region0: #{compression_forward.2}
  #allocation0 [shape = 'u32[]', space=smem, size = 0x4, offset = 0x4, fixed_abs, tag = 'smem constant byte address 0x4 - core index']
  #allocation1 [shape = 'u32[144,128]{1,0:T(1,128)}', space=vmem, size = 0x12000, scoped, tag = 'internal scratch']
  %s0 = inlined_call_operand.vmem [shape: f32[8,128], index: 0, kind: input, shape index: {}]
  %s1 = inlined_call_operand.vmem [shape: bf16[128,128], index: 1, kind: input, shape index: {}]
  %s2 = inlined_call_operand.vmem [shape: f32[1,128], index: 2, kind: input, shape index: {}]
  %s3 = inlined_call_operand.vmem [shape: f32[1,128,128], index: 3, kind: output, shape index: {}]
  %s4 = sld [smem:[#allocation0]]
  $region26: #{compression_forward.2} parent=0
    _
  %s6 = ssub.s32 1, %s4
  %s7 = scalar_select 0, %s6, %s4
  // Predicated region
  $region2: #{compression_forward.2} parent=0 // pred_check
    _
  $region3: #{compression_forward.2} parent=0 // pred_check_branch
    %9 = sbr.rel (0) target = $region5
  $region4: #{compression_forward.2} parent=0 // pred_region
    %s10 = sadd.s32 0, 0
    %p11 = scmp.lt.s32.totalorder %s10, 0
    %s12 = scalar_select %p11, %s10, 0
    %p13 = scmp.lt.s32.totalorder %s12, 0
    %s14 = scalar_select %p13, %s12, 0
    %s15 = smul.addr %s14, 8
    %s16 = scalar_lea.vmem %s0, %s15
    %s17 = sadd.s32 0, 0
    %p18 = scmp.lt.s32.totalorder %s17, 0
    %s19 = scalar_select %p18, %s17, 0
  $region5: #{compression_forward.2} parent=0 // pred_fallthru
    _
  // Predicated region
  $region6: #{compression_forward.2} parent=0 // pred_check
    _
  $region7: #{compression_forward.2} parent=0 // pred_check_branch
    %21 = sbr.rel (0) target = $region9
  $region8: #{compression_forward.2} parent=0 // pred_region
    _
  $region9: #{compression_forward.2} parent=0 // pred_fallthru
    _
  // Predicated region
  $region10: #{compression_forward.2} parent=0 // pred_check
    _
  $region11: #{compression_forward.2} parent=0 // pred_check_branch
    %23 = sbr.rel (0) target = $region13
  $region12: #{compression_forward.2} parent=0 // pred_region
    _
  $region13: #{compression_forward.2} parent=0 // pred_fallthru
    _
  %s24 = sadd.s32 0, 0
  %p25 = scmp.lt.s32.totalorder %s24, 0
  %s26 = scalar_select %p25, %s24, 0
  %p27 = scmp.lt.s32.totalorder %s26, 0
  %s28 = scalar_select %p27, %s26, 0
  %s29 = smul.addr %s28, 8
  %s30 = scalar_lea.vmem %s0, %s29
  %s31 = sadd.s32 0, 0
  %p32 = scmp.lt.s32.totalorder %s31, 0
  %s33 = scalar_select %p32, %s31, 0
  %p34 = scmp.lt.s32.totalorder %s33, 0
  %s35 = scalar_select %p34, %s33, 0
  %s36 = smul.addr %s35, 8
  %s37 = scalar_lea.vmem %s0, %s36
  %s38 = sadd.s32 0, 0
  %p39 = scmp.lt.s32.totalorder %s38, 0
  %s40 = scalar_select %p39, %s38, 0
  %p42 = scmp.eq.s32.totalorder 0, 0
  // Predicated region
  $region14: #{compression_forward.2} parent=0 // pred_check
    %p43 = pneg %p42
  $region15: #{compression_forward.2} parent=0 // pred_check_branch
    %45 = sbr.rel (%p43) target = $region17
  $region16: #{compression_forward.2} parent=0 // pred_region
    %46 = vst [vmem:[%s3] sm:$0xff] 0.0
    %47 = vst [vmem:[%s3 + $0x8] sm:$0xff] 0.0
    %48 = vst [vmem:[%s3 + $0x10] sm:$0xff] 0.0
    %49 = vst [vmem:[%s3 + $0x18] sm:$0xff] 0.0
    %50 = vst [vmem:[%s3 + $0x20] sm:$0xff] 0.0
    %51 = vst [vmem:[%s3 + $0x28] sm:$0xff] 0.0
    %52 = vst [vmem:[%s3 + $0x30] sm:$0xff] 0.0
    %53 = vst [vmem:[%s3 + $0x38] sm:$0xff] 0.0
    %54 = vst [vmem:[%s3 + $0x40] sm:$0xff] 0.0
    %55 = vst [vmem:[%s3 + $0x48] sm:$0xff] 0.0
    %56 = vst [vmem:[%s3 + $0x50] sm:$0xff] 0.0
    %57 = vst [vmem:[%s3 + $0x58] sm:$0xff] 0.0
    %58 = vst [vmem:[%s3 + $0x60] sm:$0xff] 0.0
    %59 = vst [vmem:[%s3 + $0x68] sm:$0xff] 0.0
    %60 = vst [vmem:[%s3 + $0x70] sm:$0xff] 0.0
    %61 = vst [vmem:[%s3 + $0x78] sm:$0xff] 0.0
  $region17: #{compression_forward.2} parent=0 // pred_fallthru
    _
  %s62 = sadd.s32 0, 0
  %s63 = smul.u32 %s62, 8
  %v64 = vlaneseq
  %v65 = vshrl.u32 %v64, 7
  %v66 = vstv %s63
  %v67 = vadd.s32 %v66, %v65
  %vm68 = vcmp.lt.s32.totalorder %v67, 8
  %v69 = vld [vmem:[%s37] sm:$0xff]
  %v70 = vsel %vm68, 1, 0
  %vm71 = vcmp.eq.s32.totalorder %v70, 1
  %v72 = vsel %vm71, %v69, 0.0
  %v73 = vpack.c.bf16 %v72, %v72
  %v74 = vld [vmem:[%s1] sm:$0xf]
  %v75 = vld [vmem:[%s1 + $0x4] sm:$0xf]
  %v76 = vld [vmem:[%s1 + $0x8] sm:$0xf]
  %v77 = vld [vmem:[%s1 + $0xc] sm:$0xf]
  %v78 = vld [vmem:[%s1 + $0x10] sm:$0xf]
  %v79 = vld [vmem:[%s1 + $0x14] sm:$0xf]
  %v80 = vld [vmem:[%s1 + $0x18] sm:$0xf]
  %v81 = vld [vmem:[%s1 + $0x1c] sm:$0xf]
  %v82 = vld [vmem:[%s1 + $0x20] sm:$0xf]
  %v83 = vld [vmem:[%s1 + $0x24] sm:$0xf]
  %v84 = vld [vmem:[%s1 + $0x28] sm:$0xf]
  %v85 = vld [vmem:[%s1 + $0x2c] sm:$0xf]
  %v86 = vld [vmem:[%s1 + $0x30] sm:$0xf]
  %v87 = vld [vmem:[%s1 + $0x34] sm:$0xf]
  %v88 = vld [vmem:[%s1 + $0x38] sm:$0xf]
  %v89 = vld [vmem:[%s1 + $0x3c] sm:$0xf]
  %v90 = vld [vmem:[%s2] sm:$0x1]
  %v92 = vlaneseq
  %v93 = vshrl.u32 %v92, 7
  %v94 = vsub.s32 0, %v93
  %v95 = vrot.slane %v90, %v94
  %v113 = vunpack.c.l.b16 %v74
  %v114 = vunpack.c.l.b16 %v75
  %v115 = vunpack.c.l.b16 %v76
  %v116 = vunpack.c.l.b16 %v77
  %v117 = vunpack.c.l.b16 %v78
  %v118 = vunpack.c.l.b16 %v79
  %v119 = vunpack.c.l.b16 %v80
  %v120 = vunpack.c.l.b16 %v81
  %v121 = vunpack.c.l.b16 %v82
  %v122 = vunpack.c.l.b16 %v83
  %v123 = vunpack.c.l.b16 %v84
  %v124 = vunpack.c.l.b16 %v85
  %v125 = vunpack.c.l.b16 %v86
  %v126 = vunpack.c.l.b16 %v87
  %v127 = vunpack.c.l.b16 %v88
  %v128 = vunpack.c.l.b16 %v89
  %v129 = vpack.c.b16 %v114, %v113
  %v130 = vpack.c.b16 %v116, %v115
  %v131 = vpack.c.b16 %v118, %v117
  %v132 = vpack.c.b16 %v120, %v119
  %v133 = vpack.c.b16 %v122, %v121
  %v134 = vpack.c.b16 %v124, %v123
  %v135 = vpack.c.b16 %v126, %v125
  %v136 = vpack.c.b16 %v128, %v127
  %145 = vmatprep.subr.bf16.mxu0 0
  %146 = vmatpush1.bf16.xpose.msra.mxu0 %v129
  %147 = vmatprep.subr.bf16.mxu0 0
  %148 = vmatpush1.bf16.xpose.msra.mxu0 %v130
  %149 = vmatprep.subr.bf16.mxu0 0
  %150 = vmatpush1.bf16.xpose.msra.mxu0 %v131
  %151 = vmatprep.subr.bf16.mxu0 0
  %152 = vmatpush1.bf16.xpose.msra.mxu0 %v132
  %153 = vmatprep.subr.bf16.mxu0 0
  %154 = vmatpush1.bf16.xpose.msra.mxu0 %v133
  %155 = vmatprep.subr.bf16.mxu0 0
  %156 = vmatpush1.bf16.xpose.msra.mxu0 %v134
  %157 = vmatprep.subr.bf16.mxu0 0
  %158 = vmatpush1.bf16.xpose.msra.mxu0 %v135
  %159 = vmatprep.subr.bf16.mxu0 0
  %160 = vmatpush1.bf16.xpose.msra.mxu0 %v136
  %161 = vmatprep.subr.bf16.mxu0 0
  %162 = vmatpush1.bf16.xpose.msra.mxu0 0
  %163 = vmatprep.subr.bf16.mxu0 0
  %164 = vmatpush1.bf16.xpose.msra.mxu0 0
  %165 = vmatprep.subr.bf16.mxu0 0
  %166 = vmatpush1.bf16.xpose.msra.mxu0 0
  %167 = vmatprep.subr.bf16.mxu0 0
  %168 = vmatpush1.bf16.xpose.msra.mxu0 0
  %169 = vmatprep.subr.bf16.mxu0 0
  %170 = vmatpush1.bf16.xpose.msra.mxu0 0
  %171 = vmatprep.subr.bf16.mxu0 0
  %172 = vmatpush1.bf16.xpose.msra.mxu0 0
  %173 = vmatprep.subr.bf16.mxu0 0
  %174 = vmatpush1.bf16.xpose.msra.mxu0 0
  %175 = vmatprep.subr.bf16.mxu0 0
  %176 = vmatpush1.bf16.xpose.msra.mxu0 0
  %177 = vmatprep.mubr.bf16.mxu0 0
  %178 = vmatmul.mubr.bf16.gmra.mrb[0].mxu0 %v73
  %v179 = vpop.f32.mrb[0].mxu0
  %v180 = vadd.f32 %v95, %v179
  %v181 = vpop.f32.mrb[0].mxu0
  %v182 = vpop.f32.mrb[0].mxu0
  %v183 = vpop.f32.mrb[0].mxu0
  %184 = vdwg.mxu0
  %185 = vmax.xlane.f32.xlu0 %v180
  %v186 = vpop.xlane.xlu0 %185
  %v187 = vsub.f32 %v180, %v186
  %v188 = vmul.f32 %v187, 1.442695
  %v189 = vpow.pop %v188
  %190 = vadd.xlane.f32.xlu0 %v189
  %v191 = vpop.xlane.xlu0 %190
  %v192 = vrcp.pop %v191
  %v193 = vmul.f32 %v189, %v192
  %v194 = vsel %vm71, %v193, 0.0
  %v195 = vpack.c.bf16 %v194, %v194
  %v196 = vld [vmem:[%s3] sm:$0xff]
  %v197 = vld [vmem:[%s3 + $0x8] sm:$0xff]
  %v198 = vld [vmem:[%s3 + $0x10] sm:$0xff]
  %v199 = vld [vmem:[%s3 + $0x18] sm:$0xff]
  %v200 = vld [vmem:[%s3 + $0x20] sm:$0xff]
  %v201 = vld [vmem:[%s3 + $0x28] sm:$0xff]
  %v202 = vld [vmem:[%s3 + $0x30] sm:$0xff]
  %v203 = vld [vmem:[%s3 + $0x38] sm:$0xff]
  %v204 = vld [vmem:[%s3 + $0x40] sm:$0xff]
  %v205 = vld [vmem:[%s3 + $0x48] sm:$0xff]
  %v206 = vld [vmem:[%s3 + $0x50] sm:$0xff]
  %v207 = vld [vmem:[%s3 + $0x58] sm:$0xff]
  %v208 = vld [vmem:[%s3 + $0x60] sm:$0xff]
  %v209 = vld [vmem:[%s3 + $0x68] sm:$0xff]
  %v210 = vld [vmem:[%s3 + $0x70] sm:$0xff]
  %v211 = vld [vmem:[%s3 + $0x78] sm:$0xff]
  %212 = vxpose.xlu0.c.b16.start [1/8] %v195, 128
  %213 = vxpose.xlu0.c.b16.cont [2/8] 0, 128
  %214 = vxpose.xlu0.c.b16.cont [3/8] 0, 128
  %215 = vxpose.xlu0.c.b16.cont [4/8] 0, 128
  %216 = vxpose.xlu0.c.b16.cont [5/8] 0, 128
  %217 = vxpose.xlu0.c.b16.cont [6/8] 0, 128
  %218 = vxpose.xlu0.c.b16.cont [7/8] 0, 128
  %219 = vxpose.xlu0.c.b16.end [8/8] 0, 128
  %v220 = vpop.trf.xlu0
  %v221 = vpop.trf.xlu0
  %v222 = vpop.trf.xlu0
  %v223 = vpop.trf.xlu0
  %v224 = vpop.trf.xlu0
  %v225 = vpop.trf.xlu0
  %v226 = vpop.trf.xlu0
  %v227 = vpop.trf.xlu0
  %vm228 = vcmask 64512
  %v230 = vsel %vm228, %v220, 0
  %v233 = vsel %vm228, %v221, 0
  %v236 = vsel %vm228, %v222, 0
  %v239 = vsel %vm228, %v223, 0
  %v242 = vsel %vm228, %v224, 0
  %v245 = vsel %vm228, %v225, 0
  %v248 = vsel %vm228, %v226, 0
  %v251 = vsel %vm228, %v227, 0
  %vm253 = vcmask 1043456
  %v255 = vsel %vm253, %v73, 0
  %257 = vmatprep.subr.bf16.mxu0 0
  %258 = vmatpush1.bf16.msra.mxu0 %v255
  %259 = vmatprep.subr.bf16.mxu0 0
  %260 = vmatpush1.bf16.msra.mxu0 0
  %261 = vmatprep.subr.bf16.mxu0 0
  %262 = vmatpush1.bf16.msra.mxu0 0
  %263 = vmatprep.subr.bf16.mxu0 0
  %264 = vmatpush1.bf16.msra.mxu0 0
  %265 = vmatprep.subr.bf16.mxu0 0
  %266 = vmatpush1.bf16.msra.mxu0 0
  %267 = vmatprep.subr.bf16.mxu0 0
  %268 = vmatpush1.bf16.msra.mxu0 0
  %269 = vmatprep.subr.bf16.mxu0 0
  %270 = vmatpush1.bf16.msra.mxu0 0
  %271 = vmatprep.subr.bf16.mxu0 0
  %272 = vmatpush1.bf16.msra.mxu0 0
  %273 = vmatprep.subr.bf16.mxu0 0
  %274 = vmatpush1.bf16.msra.mxu0 0
  %275 = vmatprep.subr.bf16.mxu0 0
  %276 = vmatpush1.bf16.msra.mxu0 0
  %277 = vmatprep.subr.bf16.mxu0 0
  %278 = vmatpush1.bf16.msra.mxu0 0
  %279 = vmatprep.subr.bf16.mxu0 0
  %280 = vmatpush1.bf16.msra.mxu0 0
  %281 = vmatprep.subr.bf16.mxu0 0
  %282 = vmatpush1.bf16.msra.mxu0 0
  %283 = vmatprep.subr.bf16.mxu0 0
  %284 = vmatpush1.bf16.msra.mxu0 0
  %285 = vmatprep.subr.bf16.mxu0 0
  %286 = vmatpush1.bf16.msra.mxu0 0
  %287 = vmatprep.subr.bf16.mxu0 0
  %288 = vmatpush1.bf16.msra.mxu0 0
  %289 = vmatprep.mubr.bf16.mxu0 0
  %290 = vmatmul.mubr.bf16.gmra.mrb[0].mxu0 %v230
  %v291 = vpop.f32.mrb[0].mxu0
  %v292 = vadd.f32 0.0, %v291
  %v293 = vpop.f32.mrb[0].mxu0
  %v294 = vpop.f32.mrb[0].mxu0
  %v295 = vadd.f32 0.0, %v294
  %v296 = vpop.f32.mrb[0].mxu0
  %297 = vmatprep.mubr.bf16.mxu0 0
  %298 = vmatmul.mubr.bf16.gmra.mrb[0].mxu0 %v233
  %v299 = vpop.f32.mrb[0].mxu0
  %v300 = vadd.f32 0.0, %v299
  %v301 = vpop.f32.mrb[0].mxu0
  %v302 = vpop.f32.mrb[0].mxu0
  %v303 = vadd.f32 0.0, %v302
  %v304 = vpop.f32.mrb[0].mxu0
  %305 = vmatprep.mubr.bf16.mxu0 0
  %306 = vmatmul.mubr.bf16.gmra.mrb[0].mxu0 %v236
  %v307 = vpop.f32.mrb[0].mxu0
  %v308 = vadd.f32 0.0, %v307
  %v309 = vpop.f32.mrb[0].mxu0
  %v310 = vpop.f32.mrb[0].mxu0
  %v311 = vadd.f32 0.0, %v310
  %v312 = vpop.f32.mrb[0].mxu0
  %313 = vmatprep.mubr.bf16.mxu0 0
  %314 = vmatmul.mubr.bf16.gmra.mrb[0].mxu0 %v239
  %v315 = vpop.f32.mrb[0].mxu0
  %v316 = vadd.f32 0.0, %v315
  %v317 = vpop.f32.mrb[0].mxu0
  %v318 = vpop.f32.mrb[0].mxu0
  %v319 = vadd.f32 0.0, %v318
  %v320 = vpop.f32.mrb[0].mxu0
  %321 = vmatprep.mubr.bf16.mxu0 0
  %322 = vmatmul.mubr.bf16.gmra.mrb[0].mxu0 %v242
  %v323 = vpop.f32.mrb[0].mxu0
  %v324 = vadd.f32 0.0, %v323
  %v325 = vpop.f32.mrb[0].mxu0
  %v326 = vpop.f32.mrb[0].mxu0
  %v327 = vadd.f32 0.0, %v326
  %v328 = vpop.f32.mrb[0].mxu0
  %329 = vmatprep.mubr.bf16.mxu0 0
  %330 = vmatmul.mubr.bf16.gmra.mrb[0].mxu0 %v245
  %v331 = vpop.f32.mrb[0].mxu0
  %v332 = vadd.f32 0.0, %v331
  %v333 = vpop.f32.mrb[0].mxu0
  %v334 = vpop.f32.mrb[0].mxu0
  %v335 = vadd.f32 0.0, %v334
  %v336 = vpop.f32.mrb[0].mxu0
  %337 = vmatprep.mubr.bf16.mxu0 0
  %338 = vmatmul.mubr.bf16.gmra.mrb[0].mxu0 %v248
  %v339 = vpop.f32.mrb[0].mxu0
  %v340 = vadd.f32 0.0, %v339
  %v341 = vpop.f32.mrb[0].mxu0
  %v342 = vpop.f32.mrb[0].mxu0
  %v343 = vadd.f32 0.0, %v342
  %v344 = vpop.f32.mrb[0].mxu0
  %345 = vmatprep.mubr.bf16.mxu0 0
  %346 = vmatmul.mubr.bf16.gmra.mrb[0].mxu0 %v251
  %v347 = vpop.f32.mrb[0].mxu0
  %v348 = vadd.f32 0.0, %v347
  %v349 = vpop.f32.mrb[0].mxu0
  %v350 = vpop.f32.mrb[0].mxu0
  %v351 = vadd.f32 0.0, %v350
  %v352 = vpop.f32.mrb[0].mxu0
  %353 = vdwg.mxu0
  %v354 = vadd.f32 %v196, %v292
  %v355 = vadd.f32 %v197, %v295
  %v356 = vadd.f32 %v198, %v300
  %v357 = vadd.f32 %v199, %v303
  %v358 = vadd.f32 %v200, %v308
  %v359 = vadd.f32 %v201, %v311
  %v360 = vadd.f32 %v202, %v316
  %v361 = vadd.f32 %v203, %v319
  %v362 = vadd.f32 %v204, %v324
  %v363 = vadd.f32 %v205, %v327
  %v364 = vadd.f32 %v206, %v332
  %v365 = vadd.f32 %v207, %v335
  %v366 = vadd.f32 %v208, %v340
  %v367 = vadd.f32 %v209, %v343
  %v368 = vadd.f32 %v210, %v348
  %v369 = vadd.f32 %v211, %v351
  %370 = vst [vmem:[%s3] sm:$0xff] %v354
  %371 = vst [vmem:[%s3 + $0x8] sm:$0xff] %v355
  %372 = vst [vmem:[%s3 + $0x10] sm:$0xff] %v356
  %373 = vst [vmem:[%s3 + $0x18] sm:$0xff] %v357
  %374 = vst [vmem:[%s3 + $0x20] sm:$0xff] %v358
  %375 = vst [vmem:[%s3 + $0x28] sm:$0xff] %v359
  %376 = vst [vmem:[%s3 + $0x30] sm:$0xff] %v360
  %377 = vst [vmem:[%s3 + $0x38] sm:$0xff] %v361
  %378 = vst [vmem:[%s3 + $0x40] sm:$0xff] %v362
  %379 = vst [vmem:[%s3 + $0x48] sm:$0xff] %v363
  %380 = vst [vmem:[%s3 + $0x50] sm:$0xff] %v364
  %381 = vst [vmem:[%s3 + $0x58] sm:$0xff] %v365
  %382 = vst [vmem:[%s3 + $0x60] sm:$0xff] %v366
  %383 = vst [vmem:[%s3 + $0x68] sm:$0xff] %v367
  %384 = vst [vmem:[%s3 + $0x70] sm:$0xff] %v368
  %385 = vst [vmem:[%s3 + $0x78] sm:$0xff] %v369
  // Predicated region
  $region18: #{compression_forward.2} parent=0 // pred_check
    _
  $region19: #{compression_forward.2} parent=0 // pred_check_branch
    %387 = sbr.rel (0) target = $region21
  $region20: #{compression_forward.2} parent=0 // pred_region
    _
  $region21: #{compression_forward.2} parent=0 // pred_fallthru
    _
  // Predicated region
  $region22: #{compression_forward.2} parent=0 // pred_check
    _
  $region23: #{compression_forward.2} parent=0 // pred_check_branch
    %389 = sbr.rel (0) target = $region25
  $region24: #{compression_forward.2} parent=0 // pred_region
    _
  $region25: #{compression_forward.2} parent=0 // pred_fallthru
    _

// kernel: compression_forward.3
$region0: #{compression_forward.3}
  #allocation0 [shape = 'u32[]', space=smem, size = 0x4, offset = 0x4, fixed_abs, tag = 'smem constant byte address 0x4 - core index']
  #allocation1 [shape = 'u32[144,128]{1,0:T(1,128)}', space=vmem, size = 0x12000, scoped, tag = 'internal scratch']
  %s0 = inlined_call_operand.vmem [shape: f32[8,128], index: 0, kind: input, shape index: {}]
  %s1 = inlined_call_operand.vmem [shape: bf16[128,128], index: 1, kind: input, shape index: {}]
  %s2 = inlined_call_operand.vmem [shape: f32[1,128], index: 2, kind: input, shape index: {}]
  %s3 = inlined_call_operand.vmem [shape: bf16[128,128], index: 3, kind: input, shape index: {}]
  %s4 = inlined_call_operand.hbm [shape: f32[8,128], index: 4, kind: output, shape index: {}]
  %s5 = sld [smem:[#allocation0]]
  $region26: #{compression_forward.3} parent=0
    _
  %s7 = ssub.s32 1, %s5
  %s8 = scalar_select 0, %s7, %s5
  $region1: #{compression_forward.3} parent=0
    #allocation2 [shape = 'u8[4096]{0}', space=vmem, size = 0x1000, scoped, tag = 'output window, operand 0, single buffered']
    #allocation3 [shape = 's32[1]{0}', space=sflag, size = 0x4, scoped, tag = 'scoped memory for compression_forward.3']
    %9 = vsyncpa [#allocation3], 0
    // Predicated region
    $region2: #{compression_forward.3} parent=1 // pred_check
      _
    $region3: #{compression_forward.3} parent=1 // pred_check_branch
      %11 = sbr.rel (0) target = $region5
    $region4: #{compression_forward.3} parent=1 // pred_region
      _
    $region5: #{compression_forward.3} parent=1 // pred_fallthru
      _
    // Predicated region
    $region6: #{compression_forward.3} parent=1 // pred_check
      _
    $region7: #{compression_forward.3} parent=1 // pred_check_branch
      %13 = sbr.rel (0) target = $region9
    $region8: #{compression_forward.3} parent=1 // pred_region
      _
    $region9: #{compression_forward.3} parent=1 // pred_fallthru
      _
    // Predicated region
    $region10: #{compression_forward.3} parent=1 // pred_check
      _
    $region11: #{compression_forward.3} parent=1 // pred_check_branch
      %15 = sbr.rel (0) target = $region13
    $region12: #{compression_forward.3} parent=1 // pred_region
      _
    $region13: #{compression_forward.3} parent=1 // pred_fallthru
      _
    // Predicated region
    $region14: #{compression_forward.3} parent=1 // pred_check
      _
    $region15: #{compression_forward.3} parent=1 // pred_check_branch
      %17 = sbr.rel (0) target = $region17
    $region16: #{compression_forward.3} parent=1 // pred_region
      _
    $region17: #{compression_forward.3} parent=1 // pred_fallthru
      _
    %v19 = vld [vmem:[%s0] sm:$0xff]
    %v20 = vpack.c.bf16 %v19, %v19
    %v21 = vld [vmem:[%s1] sm:$0xf]
    %v22 = vld [vmem:[%s1 + $0x4] sm:$0xf]
    %v23 = vld [vmem:[%s1 + $0x8] sm:$0xf]
    %v24 = vld [vmem:[%s1 + $0xc] sm:$0xf]
    %v25 = vld [vmem:[%s1 + $0x10] sm:$0xf]
    %v26 = vld [vmem:[%s1 + $0x14] sm:$0xf]
    %v27 = vld [vmem:[%s1 + $0x18] sm:$0xf]
    %v28 = vld [vmem:[%s1 + $0x1c] sm:$0xf]
    %v29 = vld [vmem:[%s1 + $0x20] sm:$0xf]
    %v30 = vld [vmem:[%s1 + $0x24] sm:$0xf]
    %v31 = vld [vmem:[%s1 + $0x28] sm:$0xf]
    %v32 = vld [vmem:[%s1 + $0x2c] sm:$0xf]
    %v33 = vld [vmem:[%s1 + $0x30] sm:$0xf]
    %v34 = vld [vmem:[%s1 + $0x34] sm:$0xf]
    %v35 = vld [vmem:[%s1 + $0x38] sm:$0xf]
    %v36 = vld [vmem:[%s1 + $0x3c] sm:$0xf]
    %v37 = vld [vmem:[%s2] sm:$0x1]
    %v39 = vlaneseq
    %v40 = vshrl.u32 %v39, 7
    %v41 = vsub.s32 0, %v40
    %v42 = vrot.slane %v37, %v41
    %v60 = vunpack.c.l.b16 %v21
    %v61 = vunpack.c.l.b16 %v22
    %v62 = vunpack.c.l.b16 %v23
    %v63 = vunpack.c.l.b16 %v24
    %v64 = vunpack.c.l.b16 %v25
    %v65 = vunpack.c.l.b16 %v26
    %v66 = vunpack.c.l.b16 %v27
    %v67 = vunpack.c.l.b16 %v28
    %v68 = vunpack.c.l.b16 %v29
    %v69 = vunpack.c.l.b16 %v30
    %v70 = vunpack.c.l.b16 %v31
    %v71 = vunpack.c.l.b16 %v32
    %v72 = vunpack.c.l.b16 %v33
    %v73 = vunpack.c.l.b16 %v34
    %v74 = vunpack.c.l.b16 %v35
    %v75 = vunpack.c.l.b16 %v36
    %v76 = vpack.c.b16 %v61, %v60
    %v77 = vpack.c.b16 %v63, %v62
    %v78 = vpack.c.b16 %v65, %v64
    %v79 = vpack.c.b16 %v67, %v66
    %v80 = vpack.c.b16 %v69, %v68
    %v81 = vpack.c.b16 %v71, %v70
    %v82 = vpack.c.b16 %v73, %v72
    %v83 = vpack.c.b16 %v75, %v74
    %92 = vmatprep.subr.bf16.mxu0 0
    %93 = vmatpush1.bf16.xpose.msra.mxu0 %v76
    %94 = vmatprep.subr.bf16.mxu0 0
    %95 = vmatpush1.bf16.xpose.msra.mxu0 %v77
    %96 = vmatprep.subr.bf16.mxu0 0
    %97 = vmatpush1.bf16.xpose.msra.mxu0 %v78
    %98 = vmatprep.subr.bf16.mxu0 0
    %99 = vmatpush1.bf16.xpose.msra.mxu0 %v79
    %100 = vmatprep.subr.bf16.mxu0 0
    %101 = vmatpush1.bf16.xpose.msra.mxu0 %v80
    %102 = vmatprep.subr.bf16.mxu0 0
    %103 = vmatpush1.bf16.xpose.msra.mxu0 %v81
    %104 = vmatprep.subr.bf16.mxu0 0
    %105 = vmatpush1.bf16.xpose.msra.mxu0 %v82
    %106 = vmatprep.subr.bf16.mxu0 0
    %107 = vmatpush1.bf16.xpose.msra.mxu0 %v83
    %108 = vmatprep.subr.bf16.mxu0 0
    %109 = vmatpush1.bf16.xpose.msra.mxu0 0
    %110 = vmatprep.subr.bf16.mxu0 0
    %111 = vmatpush1.bf16.xpose.msra.mxu0 0
    %112 = vmatprep.subr.bf16.mxu0 0
    %113 = vmatpush1.bf16.xpose.msra.mxu0 0
    %114 = vmatprep.subr.bf16.mxu0 0
    %115 = vmatpush1.bf16.xpose.msra.mxu0 0
    %116 = vmatprep.subr.bf16.mxu0 0
    %117 = vmatpush1.bf16.xpose.msra.mxu0 0
    %118 = vmatprep.subr.bf16.mxu0 0
    %119 = vmatpush1.bf16.xpose.msra.mxu0 0
    %120 = vmatprep.subr.bf16.mxu0 0
    %121 = vmatpush1.bf16.xpose.msra.mxu0 0
    %122 = vmatprep.subr.bf16.mxu0 0
    %123 = vmatpush1.bf16.xpose.msra.mxu0 0
    %124 = vmatprep.mubr.bf16.mxu0 0
    %125 = vmatmul.mubr.bf16.gmra.mrb[0].mxu0 %v20
    %v126 = vpop.f32.mrb[0].mxu0
    %v127 = vadd.f32 %v42, %v126
    %v128 = vpop.f32.mrb[0].mxu0
    %v129 = vpop.f32.mrb[0].mxu0
    %v130 = vpop.f32.mrb[0].mxu0
    %131 = vdwg.mxu0
    %132 = vmax.xlane.f32.xlu0 %v127
    %v133 = vpop.xlane.xlu0 %132
    %v134 = vsub.f32 %v127, %v133
    %v135 = vmul.f32 %v134, 1.442695
    %v136 = vpow.pop %v135
    %137 = vadd.xlane.f32.xlu0 %v136
    %v138 = vpop.xlane.xlu0 %137
    %v139 = vrcp.pop %v138
    %v140 = vmul.f32 %v136, %v139
    %v141 = vmul.f32 %v140, 0.0001
    %v142 = vpack.c.bf16 %v141, %v141
    %v143 = vld [vmem:[%s3] sm:$0xf]
    %v144 = vld [vmem:[%s3 + $0x4] sm:$0xf]
    %v145 = vld [vmem:[%s3 + $0x8] sm:$0xf]
    %v146 = vld [vmem:[%s3 + $0xc] sm:$0xf]
    %v147 = vld [vmem:[%s3 + $0x10] sm:$0xf]
    %v148 = vld [vmem:[%s3 + $0x14] sm:$0xf]
    %v149 = vld [vmem:[%s3 + $0x18] sm:$0xf]
    %v150 = vld [vmem:[%s3 + $0x1c] sm:$0xf]
    %v151 = vld [vmem:[%s3 + $0x20] sm:$0xf]
    %v152 = vld [vmem:[%s3 + $0x24] sm:$0xf]
    %v153 = vld [vmem:[%s3 + $0x28] sm:$0xf]
    %v154 = vld [vmem:[%s3 + $0x2c] sm:$0xf]
    %v155 = vld [vmem:[%s3 + $0x30] sm:$0xf]
    %v156 = vld [vmem:[%s3 + $0x34] sm:$0xf]
    %v157 = vld [vmem:[%s3 + $0x38] sm:$0xf]
    %v158 = vld [vmem:[%s3 + $0x3c] sm:$0xf]
    %v175 = vunpack.c.l.b16 %v143
    %v176 = vunpack.c.l.b16 %v144
    %v177 = vunpack.c.l.b16 %v145
    %v178 = vunpack.c.l.b16 %v146
    %v179 = vunpack.c.l.b16 %v147
    %v180 = vunpack.c.l.b16 %v148
    %v181 = vunpack.c.l.b16 %v149
    %v182 = vunpack.c.l.b16 %v150
    %v183 = vunpack.c.l.b16 %v151
    %v184 = vunpack.c.l.b16 %v152
    %v185 = vunpack.c.l.b16 %v153
    %v186 = vunpack.c.l.b16 %v154
    %v187 = vunpack.c.l.b16 %v155
    %v188 = vunpack.c.l.b16 %v156
    %v189 = vunpack.c.l.b16 %v157
    %v190 = vunpack.c.l.b16 %v158
    %v191 = vpack.c.b16 %v176, %v175
    %v192 = vpack.c.b16 %v178, %v177
    %v193 = vpack.c.b16 %v180, %v179
    %v194 = vpack.c.b16 %v182, %v181
    %v195 = vpack.c.b16 %v184, %v183
    %v196 = vpack.c.b16 %v186, %v185
    %v197 = vpack.c.b16 %v188, %v187
    %v198 = vpack.c.b16 %v190, %v189
    %207 = vmatprep.subr.bf16.mxu0 0
    %208 = vmatpush1.bf16.msra.mxu0 %v191
    %209 = vmatprep.subr.bf16.mxu0 0
    %210 = vmatpush1.bf16.msra.mxu0 %v192
    %211 = vmatprep.subr.bf16.mxu0 0
    %212 = vmatpush1.bf16.msra.mxu0 %v193
    %213 = vmatprep.subr.bf16.mxu0 0
    %214 = vmatpush1.bf16.msra.mxu0 %v194
    %215 = vmatprep.subr.bf16.mxu0 0
    %216 = vmatpush1.bf16.msra.mxu0 %v195
    %217 = vmatprep.subr.bf16.mxu0 0
    %218 = vmatpush1.bf16.msra.mxu0 %v196
    %219 = vmatprep.subr.bf16.mxu0 0
    %220 = vmatpush1.bf16.msra.mxu0 %v197
    %221 = vmatprep.subr.bf16.mxu0 0
    %222 = vmatpush1.bf16.msra.mxu0 %v198
    %223 = vmatprep.subr.bf16.mxu0 0
    %224 = vmatpush1.bf16.msra.mxu0 0
    %225 = vmatprep.subr.bf16.mxu0 0
    %226 = vmatpush1.bf16.msra.mxu0 0
    %227 = vmatprep.subr.bf16.mxu0 0
    %228 = vmatpush1.bf16.msra.mxu0 0
    %229 = vmatprep.subr.bf16.mxu0 0
    %230 = vmatpush1.bf16.msra.mxu0 0
    %231 = vmatprep.subr.bf16.mxu0 0
    %232 = vmatpush1.bf16.msra.mxu0 0
    %233 = vmatprep.subr.bf16.mxu0 0
    %234 = vmatpush1.bf16.msra.mxu0 0
    %235 = vmatprep.subr.bf16.mxu0 0
    %236 = vmatpush1.bf16.msra.mxu0 0
    %237 = vmatprep.subr.bf16.mxu0 0
    %238 = vmatpush1.bf16.msra.mxu0 0
    %239 = vmatprep.mubr.bf16.mxu0 0
    %240 = vmatmul.mubr.bf16.gmra.mrb[0].mxu0 %v142
    %v241 = vpop.f32.mrb[0].mxu0
    %v242 = vadd.f32 0.0, %v241
    %v243 = vpop.f32.mrb[0].mxu0
    %v244 = vpop.f32.mrb[0].mxu0
    %v245 = vpop.f32.mrb[0].mxu0
    %246 = vdwg.mxu0
    %v247 = vadd.f32 %v19, %v242
    %248 = vst [vmem:[#allocation2] sm:$0xff] %v247
    // Predicated region
    $region18: #{compression_forward.3} parent=1 // pred_check
      _
    $region19: #{compression_forward.3} parent=1 // pred_check_branch
      %250 = sbr.rel (0) target = $region21
    $region20: #{compression_forward.3} parent=1 // pred_region
      %s252 = ssub.s32 128, 128
      %253 = vsyncadd [#allocation3], %s252
      %s255 = sshll.u32 [#allocation2], 4
      %s256 = int_to_ptr.vmem [resolvable:$true] %s255
      %258 = dma.vmem_to_hbm [thread:$0]  %s256, 128, %s4, [#allocation3]
    $region21: #{compression_forward.3} parent=1 // pred_fallthru
      _
    // Predicated region
    $region22: #{compression_forward.3} parent=1 // pred_check
      _
    $region23: #{compression_forward.3} parent=1 // pred_check_branch
      %260 = sbr.rel (0) target = $region25
    $region24: #{compression_forward.3} parent=1 // pred_region
      %261 = dma.done [#allocation3], 128
    $region25: #{compression_forward.3} parent=1 // pred_fallthru
      _
    %262 = vsyncpa [#allocation3], 1

// kernel: compression_forward.2
$region0: #{compression_forward.2}
  #allocation0 [shape = 'u32[]', space=smem, size = 0x4, offset = 0x4, fixed_abs, tag = 'smem constant byte address 0x4 - core index']
  #allocation1 [shape = 'u32[144,128]{1,0:T(1,128)}', space=vmem, size = 0x12000, scoped, tag = 'internal scratch']
  %s0 = inlined_call_operand.vmem [shape: f32[8,128], index: 0, kind: input, shape index: {}]
  %s1 = inlined_call_operand.vmem [shape: bf16[128,128], index: 1, kind: input, shape index: {}]
  %s2 = inlined_call_operand.vmem [shape: f32[1,128], index: 2, kind: input, shape index: {}]
  %s3 = inlined_call_operand.vmem [shape: f32[1,128,128], index: 3, kind: output, shape index: {}]
  %s4 = sld [smem:[#allocation0]]
  $region26: #{compression_forward.2} parent=0
    _
  %s6 = ssub.s32 1, %s4
  %s7 = scalar_select 0, %s6, %s4
  // Predicated region
  $region2: #{compression_forward.2} parent=0 // pred_check
    _
  $region3: #{compression_forward.2} parent=0 // pred_check_branch
    %9 = sbr.rel (0) target = $region5
  $region4: #{compression_forward.2} parent=0 // pred_region
    %s10 = sadd.s32 0, 0
    %p11 = scmp.lt.s32.totalorder %s10, 0
    %s12 = scalar_select %p11, %s10, 0
    %p13 = scmp.lt.s32.totalorder %s12, 0
    %s14 = scalar_select %p13, %s12, 0
    %s15 = smul.addr %s14, 8
    %s16 = scalar_lea.vmem %s0, %s15
    %s17 = sadd.s32 0, 0
    %p18 = scmp.lt.s32.totalorder %s17, 0
    %s19 = scalar_select %p18, %s17, 0
  $region5: #{compression_forward.2} parent=0 // pred_fallthru
    _
  // Predicated region
  $region6: #{compression_forward.2} parent=0 // pred_check
    _
  $region7: #{compression_forward.2} parent=0 // pred_check_branch
    %21 = sbr.rel (0) target = $region9
  $region8: #{compression_forward.2} parent=0 // pred_region
    _
  $region9: #{compression_forward.2} parent=0 // pred_fallthru
    _
  // Predicated region
  $region10: #{compression_forward.2} parent=0 // pred_check
    _
  $region11: #{compression_forward.2} parent=0 // pred_check_branch
    %23 = sbr.rel (0) target = $region13
  $region12: #{compression_forward.2} parent=0 // pred_region
    _
  $region13: #{compression_forward.2} parent=0 // pred_fallthru
    _
  %s24 = sadd.s32 0, 0
  %p25 = scmp.lt.s32.totalorder %s24, 0
  %s26 = scalar_select %p25, %s24, 0
  %p27 = scmp.lt.s32.totalorder %s26, 0
  %s28 = scalar_select %p27, %s26, 0
  %s29 = smul.addr %s28, 8
  %s30 = scalar_lea.vmem %s0, %s29
  %s31 = sadd.s32 0, 0
  %p32 = scmp.lt.s32.totalorder %s31, 0
  %s33 = scalar_select %p32, %s31, 0
  %p34 = scmp.lt.s32.totalorder %s33, 0
  %s35 = scalar_select %p34, %s33, 0
  %s36 = smul.addr %s35, 8
  %s37 = scalar_lea.vmem %s0, %s36
  %s38 = sadd.s32 0, 0
  %p39 = scmp.lt.s32.totalorder %s38, 0
  %s40 = scalar_select %p39, %s38, 0
  %p42 = scmp.eq.s32.totalorder 0, 0
  // Predicated region
  $region14: #{compression_forward.2} parent=0 // pred_check
    %p43 = pneg %p42
  $region15: #{compression_forward.2} parent=0 // pred_check_branch
    %45 = sbr.rel (%p43) target = $region17
  $region16: #{compression_forward.2} parent=0 // pred_region
    %46 = vst [vmem:[%s3] sm:$0xff] 0.0
    %47 = vst [vmem:[%s3 + $0x8] sm:$0xff] 0.0
    %48 = vst [vmem:[%s3 + $0x10] sm:$0xff] 0.0
    %49 = vst [vmem:[%s3 + $0x18] sm:$0xff] 0.0
    %50 = vst [vmem:[%s3 + $0x20] sm:$0xff] 0.0
    %51 = vst [vmem:[%s3 + $0x28] sm:$0xff] 0.0
    %52 = vst [vmem:[%s3 + $0x30] sm:$0xff] 0.0
    %53 = vst [vmem:[%s3 + $0x38] sm:$0xff] 0.0
    %54 = vst [vmem:[%s3 + $0x40] sm:$0xff] 0.0
    %55 = vst [vmem:[%s3 + $0x48] sm:$0xff] 0.0
    %56 = vst [vmem:[%s3 + $0x50] sm:$0xff] 0.0
    %57 = vst [vmem:[%s3 + $0x58] sm:$0xff] 0.0
    %58 = vst [vmem:[%s3 + $0x60] sm:$0xff] 0.0
    %59 = vst [vmem:[%s3 + $0x68] sm:$0xff] 0.0
    %60 = vst [vmem:[%s3 + $0x70] sm:$0xff] 0.0
    %61 = vst [vmem:[%s3 + $0x78] sm:$0xff] 0.0
  $region17: #{compression_forward.2} parent=0 // pred_fallthru
    _
  %s62 = sadd.s32 0, 0
  %s63 = smul.u32 %s62, 8
  %v64 = vlaneseq
  %v65 = vshrl.u32 %v64, 7
  %v66 = vstv %s63
  %v67 = vadd.s32 %v66, %v65
  %vm68 = vcmp.lt.s32.totalorder %v67, 8
  %v69 = vld [vmem:[%s37] sm:$0xff]
  %v70 = vsel %vm68, 1, 0
  %vm71 = vcmp.eq.s32.totalorder %v70, 1
  %v72 = vsel %vm71, %v69, 0.0
  %v73 = vpack.c.bf16 %v72, %v72
  %v74 = vld [vmem:[%s1] sm:$0xf]
  %v75 = vld [vmem:[%s1 + $0x4] sm:$0xf]
  %v76 = vld [vmem:[%s1 + $0x8] sm:$0xf]
  %v77 = vld [vmem:[%s1 + $0xc] sm:$0xf]
  %v78 = vld [vmem:[%s1 + $0x10] sm:$0xf]
  %v79 = vld [vmem:[%s1 + $0x14] sm:$0xf]
  %v80 = vld [vmem:[%s1 + $0x18] sm:$0xf]
  %v81 = vld [vmem:[%s1 + $0x1c] sm:$0xf]
  %v82 = vld [vmem:[%s1 + $0x20] sm:$0xf]
  %v83 = vld [vmem:[%s1 + $0x24] sm:$0xf]
  %v84 = vld [vmem:[%s1 + $0x28] sm:$0xf]
  %v85 = vld [vmem:[%s1 + $0x2c] sm:$0xf]
  %v86 = vld [vmem:[%s1 + $0x30] sm:$0xf]
  %v87 = vld [vmem:[%s1 + $0x34] sm:$0xf]
  %v88 = vld [vmem:[%s1 + $0x38] sm:$0xf]
  %v89 = vld [vmem:[%s1 + $0x3c] sm:$0xf]
  %v90 = vld [vmem:[%s2] sm:$0x1]
  %v92 = vlaneseq
  %v93 = vshrl.u32 %v92, 7
  %v94 = vsub.s32 0, %v93
  %v95 = vrot.slane %v90, %v94
  %v113 = vunpack.c.l.b16 %v74
  %v114 = vunpack.c.l.b16 %v75
  %v115 = vunpack.c.l.b16 %v76
  %v116 = vunpack.c.l.b16 %v77
  %v117 = vunpack.c.l.b16 %v78
  %v118 = vunpack.c.l.b16 %v79
  %v119 = vunpack.c.l.b16 %v80
  %v120 = vunpack.c.l.b16 %v81
  %v121 = vunpack.c.l.b16 %v82
  %v122 = vunpack.c.l.b16 %v83
  %v123 = vunpack.c.l.b16 %v84
  %v124 = vunpack.c.l.b16 %v85
  %v125 = vunpack.c.l.b16 %v86
  %v126 = vunpack.c.l.b16 %v87
  %v127 = vunpack.c.l.b16 %v88
  %v128 = vunpack.c.l.b16 %v89
  %v129 = vpack.c.b16 %v114, %v113
  %v130 = vpack.c.b16 %v116, %v115
  %v131 = vpack.c.b16 %v118, %v117
  %v132 = vpack.c.b16 %v120, %v119
  %v133 = vpack.c.b16 %v122, %v121
  %v134 = vpack.c.b16 %v124, %v123
  %v135 = vpack.c.b16 %v126, %v125
  %v136 = vpack.c.b16 %v128, %v127
  %145 = vmatprep.subr.bf16.mxu0 0
  %146 = vmatpush1.bf16.xpose.msra.mxu0 %v129
  %147 = vmatprep.subr.bf16.mxu0 0
  %148 = vmatpush1.bf16.xpose.msra.mxu0 %v130
  %149 = vmatprep.subr.bf16.mxu0 0
  %150 = vmatpush1.bf16.xpose.msra.mxu0 %v131
  %151 = vmatprep.subr.bf16.mxu0 0
  %152 = vmatpush1.bf16.xpose.msra.mxu0 %v132
  %153 = vmatprep.subr.bf16.mxu0 0
  %154 = vmatpush1.bf16.xpose.msra.mxu0 %v133
  %155 = vmatprep.subr.bf16.mxu0 0
  %156 = vmatpush1.bf16.xpose.msra.mxu0 %v134
  %157 = vmatprep.subr.bf16.mxu0 0
  %158 = vmatpush1.bf16.xpose.msra.mxu0 %v135
  %159 = vmatprep.subr.bf16.mxu0 0
  %160 = vmatpush1.bf16.xpose.msra.mxu0 %v136
  %161 = vmatprep.subr.bf16.mxu0 0
  %162 = vmatpush1.bf16.xpose.msra.mxu0 0
  %163 = vmatprep.subr.bf16.mxu0 0
  %164 = vmatpush1.bf16.xpose.msra.mxu0 0
  %165 = vmatprep.subr.bf16.mxu0 0
  %166 = vmatpush1.bf16.xpose.msra.mxu0 0
  %167 = vmatprep.subr.bf16.mxu0 0
  %168 = vmatpush1.bf16.xpose.msra.mxu0 0
  %169 = vmatprep.subr.bf16.mxu0 0
  %170 = vmatpush1.bf16.xpose.msra.mxu0 0
  %171 = vmatprep.subr.bf16.mxu0 0
  %172 = vmatpush1.bf16.xpose.msra.mxu0 0
  %173 = vmatprep.subr.bf16.mxu0 0
  %174 = vmatpush1.bf16.xpose.msra.mxu0 0
  %175 = vmatprep.subr.bf16.mxu0 0
  %176 = vmatpush1.bf16.xpose.msra.mxu0 0
  %177 = vmatprep.mubr.bf16.mxu0 0
  %178 = vmatmul.mubr.bf16.gmra.mrb[0].mxu0 %v73
  %v179 = vpop.f32.mrb[0].mxu0
  %v180 = vadd.f32 %v95, %v179
  %v181 = vpop.f32.mrb[0].mxu0
  %v182 = vpop.f32.mrb[0].mxu0
  %v183 = vpop.f32.mrb[0].mxu0
  %184 = vdwg.mxu0
  %185 = vmax.xlane.f32.xlu0 %v180
  %v186 = vpop.xlane.xlu0 %185
  %v187 = vsub.f32 %v180, %v186
  %v188 = vmul.f32 %v187, 1.442695
  %v189 = vpow.pop %v188
  %190 = vadd.xlane.f32.xlu0 %v189
  %v191 = vpop.xlane.xlu0 %190
  %v192 = vrcp.pop %v191
  %v193 = vmul.f32 %v189, %v192
  %v194 = vsel %vm71, %v193, 0.0
  %v195 = vpack.c.bf16 %v194, %v194
  %v196 = vld [vmem:[%s3] sm:$0xff]
  %v197 = vld [vmem:[%s3 + $0x8] sm:$0xff]
  %v198 = vld [vmem:[%s3 + $0x10] sm:$0xff]
  %v199 = vld [vmem:[%s3 + $0x18] sm:$0xff]
  %v200 = vld [vmem:[%s3 + $0x20] sm:$0xff]
  %v201 = vld [vmem:[%s3 + $0x28] sm:$0xff]
  %v202 = vld [vmem:[%s3 + $0x30] sm:$0xff]
  %v203 = vld [vmem:[%s3 + $0x38] sm:$0xff]
  %v204 = vld [vmem:[%s3 + $0x40] sm:$0xff]
  %v205 = vld [vmem:[%s3 + $0x48] sm:$0xff]
  %v206 = vld [vmem:[%s3 + $0x50] sm:$0xff]
  %v207 = vld [vmem:[%s3 + $0x58] sm:$0xff]
  %v208 = vld [vmem:[%s3 + $0x60] sm:$0xff]
  %v209 = vld [vmem:[%s3 + $0x68] sm:$0xff]
  %v210 = vld [vmem:[%s3 + $0x70] sm:$0xff]
  %v211 = vld [vmem:[%s3 + $0x78] sm:$0xff]
  %212 = vxpose.xlu0.c.b16.start [1/8] %v195, 128
  %213 = vxpose.xlu0.c.b16.cont [2/8] 0, 128
  %214 = vxpose.xlu0.c.b16.cont [3/8] 0, 128
  %215 = vxpose.xlu0.c.b16.cont [4/8] 0, 128
  %216 = vxpose.xlu0.c.b16.cont [5/8] 0, 128
  %217 = vxpose.xlu0.c.b16.cont [6/8] 0, 128
  %218 = vxpose.xlu0.c.b16.cont [7/8] 0, 128
  %219 = vxpose.xlu0.c.b16.end [8/8] 0, 128
  %v220 = vpop.trf.xlu0
  %v221 = vpop.trf.xlu0
  %v222 = vpop.trf.xlu0
  %v223 = vpop.trf.xlu0
  %v224 = vpop.trf.xlu0
  %v225 = vpop.trf.xlu0
  %v226 = vpop.trf.xlu0
  %v227 = vpop.trf.xlu0
  %vm228 = vcmask 64512
  %v230 = vsel %vm228, %v220, 0
  %v233 = vsel %vm228, %v221, 0
  %v236 = vsel %vm228, %v222, 0
  %v239 = vsel %vm228, %v223, 0
  %v242 = vsel %vm228, %v224, 0
  %v245 = vsel %vm228, %v225, 0
  %v248 = vsel %vm228, %v226, 0
  %v251 = vsel %vm228, %v227, 0
  %vm253 = vcmask 1043456
  %v255 = vsel %vm253, %v73, 0
  %257 = vmatprep.subr.bf16.mxu0 0
  %258 = vmatpush1.bf16.msra.mxu0 %v255
  %259 = vmatprep.subr.bf16.mxu0 0
  %260 = vmatpush1.bf16.msra.mxu0 0
  %261 = vmatprep.subr.bf16.mxu0 0
  %262 = vmatpush1.bf16.msra.mxu0 0
  %263 = vmatprep.subr.bf16.mxu0 0
  %264 = vmatpush1.bf16.msra.mxu0 0
  %265 = vmatprep.subr.bf16.mxu0 0
  %266 = vmatpush1.bf16.msra.mxu0 0
  %267 = vmatprep.subr.bf16.mxu0 0
  %268 = vmatpush1.bf16.msra.mxu0 0
  %269 = vmatprep.subr.bf16.mxu0 0
  %270 = vmatpush1.bf16.msra.mxu0 0
  %271 = vmatprep.subr.bf16.mxu0 0
  %272 = vmatpush1.bf16.msra.mxu0 0
  %273 = vmatprep.subr.bf16.mxu0 0
  %274 = vmatpush1.bf16.msra.mxu0 0
  %275 = vmatprep.subr.bf16.mxu0 0
  %276 = vmatpush1.bf16.msra.mxu0 0
  %277 = vmatprep.subr.bf16.mxu0 0
  %278 = vmatpush1.bf16.msra.mxu0 0
  %279 = vmatprep.subr.bf16.mxu0 0
  %280 = vmatpush1.bf16.msra.mxu0 0
  %281 = vmatprep.subr.bf16.mxu0 0
  %282 = vmatpush1.bf16.msra.mxu0 0
  %283 = vmatprep.subr.bf16.mxu0 0
  %284 = vmatpush1.bf16.msra.mxu0 0
  %285 = vmatprep.subr.bf16.mxu0 0
  %286 = vmatpush1.bf16.msra.mxu0 0
  %287 = vmatprep.subr.bf16.mxu0 0
  %288 = vmatpush1.bf16.msra.mxu0 0
  %289 = vmatprep.mubr.bf16.mxu0 0
  %290 = vmatmul.mubr.bf16.gmra.mrb[0].mxu0 %v230
  %v291 = vpop.f32.mrb[0].mxu0
  %v292 = vadd.f32 0.0, %v291
  %v293 = vpop.f32.mrb[0].mxu0
  %v294 = vpop.f32.mrb[0].mxu0
  %v295 = vadd.f32 0.0, %v294
  %v296 = vpop.f32.mrb[0].mxu0
  %297 = vmatprep.mubr.bf16.mxu0 0
  %298 = vmatmul.mubr.bf16.gmra.mrb[0].mxu0 %v233
  %v299 = vpop.f32.mrb[0].mxu0
  %v300 = vadd.f32 0.0, %v299
  %v301 = vpop.f32.mrb[0].mxu0
  %v302 = vpop.f32.mrb[0].mxu0
  %v303 = vadd.f32 0.0, %v302
  %v304 = vpop.f32.mrb[0].mxu0
  %305 = vmatprep.mubr.bf16.mxu0 0
  %306 = vmatmul.mubr.bf16.gmra.mrb[0].mxu0 %v236
  %v307 = vpop.f32.mrb[0].mxu0
  %v308 = vadd.f32 0.0, %v307
  %v309 = vpop.f32.mrb[0].mxu0
  %v310 = vpop.f32.mrb[0].mxu0
  %v311 = vadd.f32 0.0, %v310
  %v312 = vpop.f32.mrb[0].mxu0
  %313 = vmatprep.mubr.bf16.mxu0 0
  %314 = vmatmul.mubr.bf16.gmra.mrb[0].mxu0 %v239
  %v315 = vpop.f32.mrb[0].mxu0
  %v316 = vadd.f32 0.0, %v315
  %v317 = vpop.f32.mrb[0].mxu0
  %v318 = vpop.f32.mrb[0].mxu0
  %v319 = vadd.f32 0.0, %v318
  %v320 = vpop.f32.mrb[0].mxu0
  %321 = vmatprep.mubr.bf16.mxu0 0
  %322 = vmatmul.mubr.bf16.gmra.mrb[0].mxu0 %v242
  %v323 = vpop.f32.mrb[0].mxu0
  %v324 = vadd.f32 0.0, %v323
  %v325 = vpop.f32.mrb[0].mxu0
  %v326 = vpop.f32.mrb[0].mxu0
  %v327 = vadd.f32 0.0, %v326
  %v328 = vpop.f32.mrb[0].mxu0
  %329 = vmatprep.mubr.bf16.mxu0 0
  %330 = vmatmul.mubr.bf16.gmra.mrb[0].mxu0 %v245
  %v331 = vpop.f32.mrb[0].mxu0
  %v332 = vadd.f32 0.0, %v331
  %v333 = vpop.f32.mrb[0].mxu0
  %v334 = vpop.f32.mrb[0].mxu0
  %v335 = vadd.f32 0.0, %v334
  %v336 = vpop.f32.mrb[0].mxu0
  %337 = vmatprep.mubr.bf16.mxu0 0
  %338 = vmatmul.mubr.bf16.gmra.mrb[0].mxu0 %v248
  %v339 = vpop.f32.mrb[0].mxu0
  %v340 = vadd.f32 0.0, %v339
  %v341 = vpop.f32.mrb[0].mxu0
  %v342 = vpop.f32.mrb[0].mxu0
  %v343 = vadd.f32 0.0, %v342
  %v344 = vpop.f32.mrb[0].mxu0
  %345 = vmatprep.mubr.bf16.mxu0 0
  %346 = vmatmul.mubr.bf16.gmra.mrb[0].mxu0 %v251
  %v347 = vpop.f32.mrb[0].mxu0
  %v348 = vadd.f32 0.0, %v347
  %v349 = vpop.f32.mrb[0].mxu0
  %v350 = vpop.f32.mrb[0].mxu0
  %v351 = vadd.f32 0.0, %v350
  %v352 = vpop.f32.mrb[0].mxu0
  %353 = vdwg.mxu0
  %v354 = vadd.f32 %v196, %v292
  %v355 = vadd.f32 %v197, %v295
  %v356 = vadd.f32 %v198, %v300
  %v357 = vadd.f32 %v199, %v303
  %v358 = vadd.f32 %v200, %v308
  %v359 = vadd.f32 %v201, %v311
  %v360 = vadd.f32 %v202, %v316
  %v361 = vadd.f32 %v203, %v319
  %v362 = vadd.f32 %v204, %v324
  %v363 = vadd.f32 %v205, %v327
  %v364 = vadd.f32 %v206, %v332
  %v365 = vadd.f32 %v207, %v335
  %v366 = vadd.f32 %v208, %v340
  %v367 = vadd.f32 %v209, %v343
  %v368 = vadd.f32 %v210, %v348
  %v369 = vadd.f32 %v211, %v351
  %370 = vst [vmem:[%s3] sm:$0xff] %v354
  %371 = vst [vmem:[%s3 + $0x8] sm:$0xff] %v355
  %372 = vst [vmem:[%s3 + $0x10] sm:$0xff] %v356
  %373 = vst [vmem:[%s3 + $0x18] sm:$0xff] %v357
  %374 = vst [vmem:[%s3 + $0x20] sm:$0xff] %v358
  %375 = vst [vmem:[%s3 + $0x28] sm:$0xff] %v359
  %376 = vst [vmem:[%s3 + $0x30] sm:$0xff] %v360
  %377 = vst [vmem:[%s3 + $0x38] sm:$0xff] %v361
  %378 = vst [vmem:[%s3 + $0x40] sm:$0xff] %v362
  %379 = vst [vmem:[%s3 + $0x48] sm:$0xff] %v363
  %380 = vst [vmem:[%s3 + $0x50] sm:$0xff] %v364
  %381 = vst [vmem:[%s3 + $0x58] sm:$0xff] %v365
  %382 = vst [vmem:[%s3 + $0x60] sm:$0xff] %v366
  %383 = vst [vmem:[%s3 + $0x68] sm:$0xff] %v367
  %384 = vst [vmem:[%s3 + $0x70] sm:$0xff] %v368
  %385 = vst [vmem:[%s3 + $0x78] sm:$0xff] %v369
  // Predicated region
  $region18: #{compression_forward.2} parent=0 // pred_check
    _
  $region19: #{compression_forward.2} parent=0 // pred_check_branch
    %387 = sbr.rel (0) target = $region21
  $region20: #{compression_forward.2} parent=0 // pred_region
    _
  $region21: #{compression_forward.2} parent=0 // pred_fallthru
    _
  // Predicated region
  $region22: #{compression_forward.2} parent=0 // pred_check
    _
  $region23: #{compression_forward.2} parent=0 // pred_check_branch
    %389 = sbr.rel (0) target = $region25
  $region24: #{compression_forward.2} parent=0 // pred_region
    _
  $region25: #{compression_forward.2} parent=0 // pred_fallthru
    _

</llo_original>
